<compile_context>
chip_gen: v7x
topology: tpu7x:2x2x1
jax: 0.10.0
libtpu: 0.0.40
codegen_flags: <defaults>
</compile_context>

<pallas_src>
import functools

import jax
import jax.numpy as jnp
import numpy as np
from jax.experimental import pallas as pl
from jax.experimental.pallas import tpu as pltpu


# ----------------------------- Pallas kernel ------------------------------ #

def mvgat_view_kernel(feat_ref, adj_ref,
                      w0_ref, attn0_ref, bias0_ref,
                      w1_ref, attn1_ref, bias1_ref,
                      out_ref, agg0_ref, agg1_ref, *,
                      num_heads, d0, d1, negative_slope=0.2):
    feat = feat_ref[...]                     # (N, Fin)
    adj = adj_ref[0]                         # (N_dst, N_src)
    edge_mask = adj > 0.0                    # hoisted: shared by both layers & all heads
    neg = jnp.float32(-1e30)

    def gat_layer(x, w_merged, attn_mat, bias, agg_ref, d, apply_relu):
        hd = num_heads * d
        # merged projection: [h | res] in one MXU matmul
        hw = jnp.dot(x, w_merged, preferred_element_type=jnp.float32)   # (N, 2*hd)
        h = hw[:, :hd]
        res = hw[:, hd:]
        # attention logits for all heads in ONE matmul:
        # columns [0:H) = el (per source node), columns [H:2H) = er (per dest).
        elr = jnp.dot(h, attn_mat, preferred_element_type=jnp.float32)  # (N, 2H)

        for head in range(num_heads):                                   # static unroll
            s = head * d
            er_col = elr[:, num_heads + head:num_heads + head + 1]      # (N, 1)
            el_col = elr[:, head:head + 1]                              # (N, 1)
            # broadcasting el over dst rows requires a sublane->lane move;
            # keep the tiny (N,1)->(1,N) transpose (single XLU op per head).
            e = er_col + el_col.T                                       # (N_dst, N_src)
            e = jnp.where(e > 0, e, negative_slope * e)                 # leaky_relu
            e = jnp.where(edge_mask, e, neg)
            m = jnp.max(e, axis=-1, keepdims=True)                      # masked row max
            p = jnp.where(edge_mask, jnp.exp(e - m), 0.0)
            denom = jnp.sum(p, axis=-1, keepdims=True)
            # zero in-degree -> denom == 0 -> alpha == 0 -> aggregation == 0
            alpha = p * pl.reciprocal(jnp.maximum(denom, jnp.float32(1e-9)),
                                      approx=True)
            agg_ref[:, s:s + d] = jnp.dot(alpha, h[:, s:s + d],
                                          preferred_element_type=jnp.float32)

        out = agg_ref[...] + res + bias                                 # single pass
        if apply_relu:
            out = jnp.maximum(out, 0.0)
        return out

    # layer 0 (ReLU) -> layer 1 (no ReLU); intermediate stays in registers/VMEM.
    z = gat_layer(feat, w0_ref[0], attn0_ref[0], bias0_ref[0], agg0_ref, d0, True)
    out_ref[0] = gat_layer(z, w1_ref[0], attn1_ref[0], bias1_ref[0], agg1_ref, d1, False)


# ----------------------- host-side parameter packing ----------------------- #

def build_attn_mat(attn_l, attn_r):
    """(H, D) attn_l/attn_r -> (H*D, 2H) block-diagonal matrix so that
    h @ A gives [el_head0..el_headH-1, er_head0..er_headH-1]."""
    H, D = attn_l.shape
    eye = jnp.eye(H, dtype=jnp.float32)
    a_l = (attn_l[:, :, None] * eye[:, None, :]).reshape(H * D, H)
    a_r = (attn_r[:, :, None] * eye[:, None, :]).reshape(H * D, H)
    return jnp.concatenate([a_l, a_r], axis=1)


def pack_mvgat_params(params):
    """params[j][i] (layer j, view i) -> per-layer arrays stacked over views."""
    packed = []
    for layer_params in params:
        w = jnp.stack([jnp.concatenate([p["w"], p["w_res"]], axis=1)
                       for p in layer_params])                          # (V, Fin, 2*H*D)
        attn = jnp.stack([build_attn_mat(p["attn_l"], p["attn_r"])
                          for p in layer_params])                       # (V, H*D, 2H)
        bias = jnp.stack([p["bias"] for p in layer_params])             # (V, 1, H*D)
        packed.append({"w": w, "attn": attn, "bias": bias,
                       "num_heads": layer_params[0]["num_heads"],
                       "out_dim": layer_params[0]["out_dim"]})
    return packed


# --------------------------- MVGAT forward (glue) -------------------------- #

def mvgat_forward(adjs, feat, params):
    """params[j][i] = parameter dict for layer j of graph-view i."""
    assert len(params) == 2, "fused kernel implements num_gat_layer == 2"
    packed = pack_mvgat_params(params)
    num_views = len(adjs)
    n, fin = feat.shape
    heads = packed[0]["num_heads"]
    d0, d1 = packed[0]["out_dim"], packed[1]["out_dim"]
    hd0, hd1 = heads * d0, heads * d1
    adj_stack = jnp.stack(adjs)                                         # (V, N, N)

    kernel = functools.partial(mvgat_view_kernel,
                               num_heads=heads, d0=d0, d1=d1)

    out = pl.pallas_call(
        kernel,
        out_shape=jax.ShapeDtypeStruct((num_views, n, hd1), jnp.float32),
        grid=(num_views,),
        in_specs=[
            pl.BlockSpec((n, fin), lambda v: (0, 0)),                   # feat (shared)
            pl.BlockSpec((1, n, n), lambda v: (v, 0, 0)),               # adjacency
            pl.BlockSpec((1, fin, 2 * hd0), lambda v: (v, 0, 0)),       # layer-0 [W|Wres]
            pl.BlockSpec((1, hd0, 2 * heads), lambda v: (v, 0, 0)),     # layer-0 attn mat
            pl.BlockSpec((1, 1, hd0), lambda v: (v, 0, 0)),             # layer-0 bias
            pl.BlockSpec((1, hd0, 2 * hd1), lambda v: (v, 0, 0)),       # layer-1 [W|Wres]
            pl.BlockSpec((1, hd1, 2 * heads), lambda v: (v, 0, 0)),     # layer-1 attn mat
            pl.BlockSpec((1, 1, hd1), lambda v: (v, 0, 0)),             # layer-1 bias
        ],
        out_specs=pl.BlockSpec((1, n, hd1), lambda v: (v, 0, 0)),
        scratch_shapes=[pltpu.VMEM((n, hd0), jnp.float32),              # head accumulators
                        pltpu.VMEM((n, hd1), jnp.float32)],
        compiler_params=pltpu.CompilerParams(
            dimension_semantics=("parallel",)),                         # views -> TCs on v7x
    )(feat, adj_stack,
      packed[0]["w"], packed[0]["attn"], packed[0]["bias"],
      packed[1]["w"], packed[1]["attn"], packed[1]["bias"])

    return [out[i] for i in range(num_views)]


# ------------------------- pure-JAX reference (check) ---------------------- #

def gat_layer_ref(feat, adj, p, apply_relu):
    H, D = p["num_heads"], p["out_dim"]
    h = (feat @ p["w"]).reshape(-1, H, D)
    el = jnp.sum(h * p["attn_l"][None], -1)               # (N, H)
    er = jnp.sum(h * p["attn_r"][None], -1)
    e = er[:, None, :] + el[None, :, :]                   # (dst, src, H)
    e = jnp.where(e > 0, e, 0.2 * e)
    mask = (adj > 0)[:, :, None]
    e = jnp.where(mask, e, -1e30)
    m = jnp.max(e, axis=1, keepdims=True)
    pexp = jnp.where(mask, jnp.exp(e - m), 0.0)
    alpha = pexp / jnp.maximum(pexp.sum(1, keepdims=True), 1e-9)
    out = jnp.einsum("dsh,shf->dhf", alpha, h).reshape(-1, H * D)
    out = out + feat @ p["w_res"] + p["bias"]
    return jnp.maximum(out, 0.0) if apply_relu else out


def mvgat_forward_ref(adjs, feat, params):
    num_layers = len(params)
    views = []
    for i in range(len(adjs)):
        z = feat
        for j in range(num_layers):
            z = gat_layer_ref(z, adjs[i], params[j][i],
                              apply_relu=(j != num_layers - 1))
        views.append(z)
    return views


# --------------------------------- setup ----------------------------------- #

def init_gat_params(key, in_dim, out_dim, num_heads):
    k1, k2, k3, k4, k5 = jax.random.split(key, 5)
    hd = num_heads * out_dim
    scale_in = 1.0 / np.sqrt(in_dim)
    return {
        "w": (jax.random.normal(k1, (in_dim, hd)) * scale_in).astype(jnp.float32),
        "attn_l": (jax.random.normal(k2, (num_heads, out_dim)) * 0.1).astype(jnp.float32),
        "attn_r": (jax.random.normal(k3, (num_heads, out_dim)) * 0.1).astype(jnp.float32),
        "w_res": (jax.random.normal(k4, (in_dim, hd)) * scale_in).astype(jnp.float32),
        "bias": (jax.random.normal(k5, (1, hd)) * 0.1).astype(jnp.float32),
        "num_heads": num_heads,
        "out_dim": out_dim,
    }


if __name__ == "__main__":
    # Module-default configuration (MVGAT defaults), small node count.
    num_graphs = 3
    num_gat_layer = 2
    in_dim = 14
    hidden_dim = 64
    emb_dim = 32
    num_heads = 2
    N = 32           # number of graph nodes

    key = jax.random.PRNGKey(0)
    k_feat, k_adj, k_par = jax.random.split(key, 3)

    feat = jax.random.normal(k_feat, (N, in_dim), dtype=jnp.float32)

    adjs = []
    for ka in jax.random.split(k_adj, num_graphs):
        adj = (jax.random.uniform(ka, (N, N)) < 0.3).astype(jnp.float32)
        adjs.append(adj)  # adj[dst, src]; zero in-degree rows allowed

    # params[j][i]: layer j, graph-view i (mirrors MVGAT.__init__ layer dims).
    layer_dims = []
    for j in range(num_gat_layer):
        if j == 0:
            layer_dims.append((in_dim, hidden_dim))
        elif j == num_gat_layer - 1:
            layer_dims.append((hidden_dim * num_heads, emb_dim // num_heads))
        else:
            layer_dims.append((hidden_dim * num_heads, hidden_dim))

    params = []
    pkeys = jax.random.split(k_par, num_gat_layer * num_graphs)
    for j in range(num_gat_layer):
        row = []
        for i in range(num_graphs):
            d_in, d_out = layer_dims[j]
            row.append(init_gat_params(pkeys[j * num_graphs + i], d_in, d_out, num_heads))
        params.append(row)

    views = mvgat_forward(adjs, feat, params)
    views = [jax.block_until_ready(v) for v in views]

    views_ref = mvgat_forward_ref(adjs, feat, params)
    for v, vr in zip(views, views_ref):
        assert v.shape == (N, emb_dim), v.shape
        np.testing.assert_allclose(np.asarray(v), np.asarray(vr),
                                   rtol=5e-2, atol=5e-2)

    print("KERNEL_OK")
</pallas_src>

<mosaic_0001>
module attributes {stable_mosaic.version = 11 : i64} {
  func.func @mvgat_view_kernel(%arg0: i32, %arg1: memref<32x14xf32, #tpu.memory_space<vmem>>, %arg2: memref<1x32x32xf32, #tpu.memory_space<vmem>>, %arg3: memref<1x14x256xf32, #tpu.memory_space<vmem>>, %arg4: memref<1x128x4xf32, #tpu.memory_space<vmem>>, %arg5: memref<1x1x128xf32, #tpu.memory_space<vmem>>, %arg6: memref<1x128x64xf32, #tpu.memory_space<vmem>>, %arg7: memref<1x32x4xf32, #tpu.memory_space<vmem>>, %arg8: memref<1x1x32xf32, #tpu.memory_space<vmem>>, %arg9: memref<1x32x32xf32, #tpu.memory_space<vmem>>, %arg10: memref<32x128xf32, #tpu.memory_space<vmem>>, %arg11: memref<32x32xf32, #tpu.memory_space<vmem>>) attributes {dimension_semantics = [#tpu.dimension_semantics<parallel>], iteration_bounds = array<i64: 3>, scalar_prefetch = 0 : i64, scratch_operands = 2 : i64, tpu.core_type = #tpu.core_type<tc>, window_params = [{pipeline_mode = #tpu.pipeline_mode<synchronous>, transform_indices = @transform_0, window_bounds = array<i64: 32, 14>}, {transform_indices = @transform_1, window_bounds = array<i64: 1, 32, 32>}, {transform_indices = @transform_2, window_bounds = array<i64: 1, 14, 256>}, {transform_indices = @transform_3, window_bounds = array<i64: 1, 128, 4>}, {transform_indices = @transform_4, window_bounds = array<i64: 1, 1, 128>}, {transform_indices = @transform_5, window_bounds = array<i64: 1, 128, 64>}, {transform_indices = @transform_6, window_bounds = array<i64: 1, 32, 4>}, {transform_indices = @transform_7, window_bounds = array<i64: 1, 1, 32>}, {transform_indices = @transform_8, window_bounds = array<i64: 1, 32, 32>}]} {
    %c0 = arith.constant 0 : index
    %c0_0 = arith.constant 0 : index
    %0 = vector.load %arg1[%c0, %c0_0] : memref<32x14xf32, #tpu.memory_space<vmem>>, vector<32x14xf32>
    %c0_1 = arith.constant 0 : index
    %c0_2 = arith.constant 0 : index
    %c0_3 = arith.constant 0 : index
    %1 = vector.load %arg2[%c0_1, %c0_2, %c0_3] : memref<1x32x32xf32, #tpu.memory_space<vmem>>, vector<1x32x32xf32>
    %2 = vector.shape_cast %1 : vector<1x32x32xf32> to vector<32x32xf32>
    %cst = arith.constant 0.000000e+00 : f32
    %3 = vector.broadcast %cst : f32 to vector<32x32xf32>
    %4 = arith.cmpf ogt, %2, %3 : vector<32x32xf32>
    %c0_4 = arith.constant 0 : index
    %c0_5 = arith.constant 0 : index
    %c0_6 = arith.constant 0 : index
    %5 = vector.load %arg3[%c0_4, %c0_5, %c0_6] : memref<1x14x256xf32, #tpu.memory_space<vmem>>, vector<1x14x256xf32>
    %6 = vector.shape_cast %5 : vector<1x14x256xf32> to vector<14x256xf32>
    %c0_7 = arith.constant 0 : index
    %c0_8 = arith.constant 0 : index
    %c0_9 = arith.constant 0 : index
    %7 = vector.load %arg4[%c0_7, %c0_8, %c0_9] : memref<1x128x4xf32, #tpu.memory_space<vmem>>, vector<1x128x4xf32>
    %8 = vector.shape_cast %7 : vector<1x128x4xf32> to vector<128x4xf32>
    %c0_10 = arith.constant 0 : index
    %c0_11 = arith.constant 0 : index
    %c0_12 = arith.constant 0 : index
    %9 = vector.load %arg5[%c0_10, %c0_11, %c0_12] : memref<1x1x128xf32, #tpu.memory_space<vmem>>, vector<1x1x128xf32>
    %10 = vector.shape_cast %9 : vector<1x1x128xf32> to vector<1x128xf32>
    %cst_13 = arith.constant dense<0.000000e+00> : vector<32x256xf32>
    %11 = tpu.matmul %0, %6, %cst_13 {dimension_numbers = #tpu.dot_dimension_numbers<[1], [0], [0], [1], [0, 0, 1, 1], [], []>} : vector<32x14xf32>, vector<14x256xf32>, vector<32x256xf32> -> vector<32x256xf32>
    %12 = vector.extract_strided_slice %11 {offsets = [0, 0], sizes = [32, 128], strides = [1, 1]} : vector<32x256xf32> to vector<32x128xf32>
    %13 = vector.extract_strided_slice %11 {offsets = [0, 128], sizes = [32, 128], strides = [1, 1]} : vector<32x256xf32> to vector<32x128xf32>
    %cst_14 = arith.constant dense<0.000000e+00> : vector<32x4xf32>
    %14 = tpu.matmul %12, %8, %cst_14 {dimension_numbers = #tpu.dot_dimension_numbers<[1], [0], [0], [1], [0, 0, 1, 1], [], []>} : vector<32x128xf32>, vector<128x4xf32>, vector<32x4xf32> -> vector<32x4xf32>
    %15 = vector.extract_strided_slice %14 {offsets = [0, 2], sizes = [32, 1], strides = [1, 1]} : vector<32x4xf32> to vector<32x1xf32>
    %16 = vector.extract_strided_slice %14 {offsets = [0, 0], sizes = [32, 1], strides = [1, 1]} : vector<32x4xf32> to vector<32x1xf32>
    %17 = tpu.transpose %16, [1, 0] : vector<32x1xf32> -> vector<1x32xf32>
    %18 = vector.broadcast %15 : vector<32x1xf32> to vector<32x32xf32>
    %19 = vector.broadcast %17 : vector<1x32xf32> to vector<32x32xf32>
    %20 = arith.addf %18, %19 : vector<32x32xf32>
    %cst_15 = arith.constant 0.000000e+00 : f32
    %21 = vector.broadcast %cst_15 : f32 to vector<32x32xf32>
    %22 = arith.cmpf ogt, %20, %21 : vector<32x32xf32>
    %cst_16 = arith.constant 2.000000e-01 : f32
    %23 = vector.broadcast %cst_16 : f32 to vector<32x32xf32>
    %24 = arith.mulf %23, %20 : vector<32x32xf32>
    %25 = arith.select %22, %20, %24 : vector<32x32xi1>, vector<32x32xf32>
    %cst_17 = arith.constant -1.000000e+30 : f32
    %26 = vector.broadcast %cst_17 : f32 to vector<32x32xf32>
    %27 = arith.select %4, %25, %26 : vector<32x32xi1>, vector<32x32xf32>
    %cst_18 = arith.constant dense<0xFF800000> : vector<32xf32>
    %28 = vector.multi_reduction <maximumf>, %27, %cst_18 [1] : vector<32x32xf32> to vector<32xf32>
    %29 = vector.shape_cast %28 : vector<32xf32> to vector<32x1xf32>
    %30 = vector.broadcast %29 : vector<32x1xf32> to vector<32x32xf32>
    %31 = arith.subf %27, %30 : vector<32x32xf32>
    %32 = math.exp %31 : vector<32x32xf32>
    %cst_19 = arith.constant 0.000000e+00 : f32
    %33 = vector.broadcast %cst_19 : f32 to vector<32x32xf32>
    %34 = arith.select %4, %32, %33 : vector<32x32xi1>, vector<32x32xf32>
    %cst_20 = arith.constant dense<0.000000e+00> : vector<32xf32>
    %35 = vector.multi_reduction <add>, %34, %cst_20 [1] : vector<32x32xf32> to vector<32xf32>
    %36 = vector.shape_cast %35 : vector<32xf32> to vector<32x1xf32>
    %cst_21 = arith.constant 9.99999971E-10 : f32
    %37 = vector.broadcast %cst_21 : f32 to vector<32x1xf32>
    %38 = arith.maximumf %36, %37 : vector<32x1xf32>
    %39 = tpu.reciprocal %38 {approx = true} : vector<32x1xf32> -> vector<32x1xf32>
    %40 = vector.broadcast %39 : vector<32x1xf32> to vector<32x32xf32>
    %41 = arith.mulf %34, %40 : vector<32x32xf32>
    %42 = vector.extract_strided_slice %12 {offsets = [0, 0], sizes = [32, 64], strides = [1, 1]} : vector<32x128xf32> to vector<32x64xf32>
    %cst_22 = arith.constant dense<0.000000e+00> : vector<32x64xf32>
    %43 = tpu.matmul %41, %42, %cst_22 {dimension_numbers = #tpu.dot_dimension_numbers<[1], [0], [0], [1], [0, 0, 1, 1], [], []>} : vector<32x32xf32>, vector<32x64xf32>, vector<32x64xf32> -> vector<32x64xf32>
    %c0_23 = arith.constant 0 : index
    %c0_24 = arith.constant 0 : index
    %44 = vector.load %arg10[%c0_23, %c0_24] : memref<32x128xf32, #tpu.memory_space<vmem>>, vector<32x64xf32>
    tpu.vector_store %arg10[%c0_23, %c0_24], %43 {strides = array<i32>} : memref<32x128xf32, #tpu.memory_space<vmem>>, vector<32x64xf32>,
    %45 = vector.extract_strided_slice %14 {offsets = [0, 3], sizes = [32, 1], strides = [1, 1]} : vector<32x4xf32> to vector<32x1xf32>
    %46 = vector.extract_strided_slice %14 {offsets = [0, 1], sizes = [32, 1], strides = [1, 1]} : vector<32x4xf32> to vector<32x1xf32>
    %47 = tpu.transpose %46, [1, 0] : vector<32x1xf32> -> vector<1x32xf32>
    %48 = vector.broadcast %45 : vector<32x1xf32> to vector<32x32xf32>
    %49 = vector.broadcast %47 : vector<1x32xf32> to vector<32x32xf32>
    %50 = arith.addf %48, %49 : vector<32x32xf32>
    %cst_25 = arith.constant 0.000000e+00 : f32
    %51 = vector.broadcast %cst_25 : f32 to vector<32x32xf32>
    %52 = arith.cmpf ogt, %50, %51 : vector<32x32xf32>
    %cst_26 = arith.constant 2.000000e-01 : f32
    %53 = vector.broadcast %cst_26 : f32 to vector<32x32xf32>
    %54 = arith.mulf %53, %50 : vector<32x32xf32>
    %55 = arith.select %52, %50, %54 : vector<32x32xi1>, vector<32x32xf32>
    %cst_27 = arith.constant -1.000000e+30 : f32
    %56 = vector.broadcast %cst_27 : f32 to vector<32x32xf32>
    %57 = arith.select %4, %55, %56 : vector<32x32xi1>, vector<32x32xf32>
    %cst_28 = arith.constant dense<0xFF800000> : vector<32xf32>
    %58 = vector.multi_reduction <maximumf>, %57, %cst_28 [1] : vector<32x32xf32> to vector<32xf32>
    %59 = vector.shape_cast %58 : vector<32xf32> to vector<32x1xf32>
    %60 = vector.broadcast %59 : vector<32x1xf32> to vector<32x32xf32>
    %61 = arith.subf %57, %60 : vector<32x32xf32>
    %62 = math.exp %61 : vector<32x32xf32>
    %cst_29 = arith.constant 0.000000e+00 : f32
    %63 = vector.broadcast %cst_29 : f32 to vector<32x32xf32>
    %64 = arith.select %4, %62, %63 : vector<32x32xi1>, vector<32x32xf32>
    %cst_30 = arith.constant dense<0.000000e+00> : vector<32xf32>
    %65 = vector.multi_reduction <add>, %64, %cst_30 [1] : vector<32x32xf32> to vector<32xf32>
    %66 = vector.shape_cast %65 : vector<32xf32> to vector<32x1xf32>
    %cst_31 = arith.constant 9.99999971E-10 : f32
    %67 = vector.broadcast %cst_31 : f32 to vector<32x1xf32>
    %68 = arith.maximumf %66, %67 : vector<32x1xf32>
    %69 = tpu.reciprocal %68 {approx = true} : vector<32x1xf32> -> vector<32x1xf32>
    %70 = vector.broadcast %69 : vector<32x1xf32> to vector<32x32xf32>
    %71 = arith.mulf %64, %70 : vector<32x32xf32>
    %72 = vector.extract_strided_slice %12 {offsets = [0, 64], sizes = [32, 64], strides = [1, 1]} : vector<32x128xf32> to vector<32x64xf32>
    %cst_32 = arith.constant dense<0.000000e+00> : vector<32x64xf32>
    %73 = tpu.matmul %71, %72, %cst_32 {dimension_numbers = #tpu.dot_dimension_numbers<[1], [0], [0], [1], [0, 0, 1, 1], [], []>} : vector<32x32xf32>, vector<32x64xf32>, vector<32x64xf32> -> vector<32x64xf32>
    %c0_33 = arith.constant 0 : index
    %c64 = arith.constant 64 : index
    %74 = vector.load %arg10[%c0_33, %c64] : memref<32x128xf32, #tpu.memory_space<vmem>>, vector<32x64xf32>
    tpu.vector_store %arg10[%c0_33, %c64], %73 {strides = array<i32>} : memref<32x128xf32, #tpu.memory_space<vmem>>, vector<32x64xf32>,
    %c0_34 = arith.constant 0 : index
    %c0_35 = arith.constant 0 : index
    %75 = vector.load %arg10[%c0_34, %c0_35] : memref<32x128xf32, #tpu.memory_space<vmem>>, vector<32x128xf32>
    %76 = arith.addf %75, %13 : vector<32x128xf32>
    %77 = vector.broadcast %10 : vector<1x128xf32> to vector<32x128xf32>
    %78 = arith.addf %76, %77 : vector<32x128xf32>
    %cst_36 = arith.constant 0.000000e+00 : f32
    %79 = vector.broadcast %cst_36 : f32 to vector<32x128xf32>
    %80 = arith.maximumf %78, %79 : vector<32x128xf32>
    %c0_37 = arith.constant 0 : index
    %c0_38 = arith.constant 0 : index
    %c0_39 = arith.constant 0 : index
    %81 = vector.load %arg6[%c0_37, %c0_38, %c0_39] : memref<1x128x64xf32, #tpu.memory_space<vmem>>, vector<1x128x64xf32>
    %82 = vector.shape_cast %81 : vector<1x128x64xf32> to vector<128x64xf32>
    %c0_40 = arith.constant 0 : index
    %c0_41 = arith.constant 0 : index
    %c0_42 = arith.constant 0 : index
    %83 = vector.load %arg7[%c0_40, %c0_41, %c0_42] : memref<1x32x4xf32, #tpu.memory_space<vmem>>, vector<1x32x4xf32>
    %84 = vector.shape_cast %83 : vector<1x32x4xf32> to vector<32x4xf32>
    %c0_43 = arith.constant 0 : index
    %c0_44 = arith.constant 0 : index
    %c0_45 = arith.constant 0 : index
    %85 = vector.load %arg8[%c0_43, %c0_44, %c0_45] : memref<1x1x32xf32, #tpu.memory_space<vmem>>, vector<1x1x32xf32>
    %86 = vector.shape_cast %85 : vector<1x1x32xf32> to vector<1x32xf32>
    %cst_46 = arith.constant dense<0.000000e+00> : vector<32x64xf32>
    %87 = tpu.matmul %80, %82, %cst_46 {dimension_numbers = #tpu.dot_dimension_numbers<[1], [0], [0], [1], [0, 0, 1, 1], [], []>} : vector<32x128xf32>, vector<128x64xf32>, vector<32x64xf32> -> vector<32x64xf32>
    %88 = vector.extract_strided_slice %87 {offsets = [0, 0], sizes = [32, 32], strides = [1, 1]} : vector<32x64xf32> to vector<32x32xf32>
    %89 = vector.extract_strided_slice %87 {offsets = [0, 32], sizes = [32, 32], strides = [1, 1]} : vector<32x64xf32> to vector<32x32xf32>
    %cst_47 = arith.constant dense<0.000000e+00> : vector<32x4xf32>
    %90 = tpu.matmul %88, %84, %cst_47 {dimension_numbers = #tpu.dot_dimension_numbers<[1], [0], [0], [1], [0, 0, 1, 1], [], []>} : vector<32x32xf32>, vector<32x4xf32>, vector<32x4xf32> -> vector<32x4xf32>
    %91 = vector.extract_strided_slice %90 {offsets = [0, 2], sizes = [32, 1], strides = [1, 1]} : vector<32x4xf32> to vector<32x1xf32>
    %92 = vector.extract_strided_slice %90 {offsets = [0, 0], sizes = [32, 1], strides = [1, 1]} : vector<32x4xf32> to vector<32x1xf32>
    %93 = tpu.transpose %92, [1, 0] : vector<32x1xf32> -> vector<1x32xf32>
    %94 = vector.broadcast %91 : vector<32x1xf32> to vector<32x32xf32>
    %95 = vector.broadcast %93 : vector<1x32xf32> to vector<32x32xf32>
    %96 = arith.addf %94, %95 : vector<32x32xf32>
    %cst_48 = arith.constant 0.000000e+00 : f32
    %97 = vector.broadcast %cst_48 : f32 to vector<32x32xf32>
    %98 = arith.cmpf ogt, %96, %97 : vector<32x32xf32>
    %cst_49 = arith.constant 2.000000e-01 : f32
    %99 = vector.broadcast %cst_49 : f32 to vector<32x32xf32>
    %100 = arith.mulf %99, %96 : vector<32x32xf32>
    %101 = arith.select %98, %96, %100 : vector<32x32xi1>, vector<32x32xf32>
    %cst_50 = arith.constant -1.000000e+30 : f32
    %102 = vector.broadcast %cst_50 : f32 to vector<32x32xf32>
    %103 = arith.select %4, %101, %102 : vector<32x32xi1>, vector<32x32xf32>
    %cst_51 = arith.constant dense<0xFF800000> : vector<32xf32>
    %104 = vector.multi_reduction <maximumf>, %103, %cst_51 [1] : vector<32x32xf32> to vector<32xf32>
    %105 = vector.shape_cast %104 : vector<32xf32> to vector<32x1xf32>
    %106 = vector.broadcast %105 : vector<32x1xf32> to vector<32x32xf32>
    %107 = arith.subf %103, %106 : vector<32x32xf32>
    %108 = math.exp %107 : vector<32x32xf32>
    %cst_52 = arith.constant 0.000000e+00 : f32
    %109 = vector.broadcast %cst_52 : f32 to vector<32x32xf32>
    %110 = arith.select %4, %108, %109 : vector<32x32xi1>, vector<32x32xf32>
    %cst_53 = arith.constant dense<0.000000e+00> : vector<32xf32>
    %111 = vector.multi_reduction <add>, %110, %cst_53 [1] : vector<32x32xf32> to vector<32xf32>
    %112 = vector.shape_cast %111 : vector<32xf32> to vector<32x1xf32>
    %cst_54 = arith.constant 9.99999971E-10 : f32
    %113 = vector.broadcast %cst_54 : f32 to vector<32x1xf32>
    %114 = arith.maximumf %112, %113 : vector<32x1xf32>
    %115 = tpu.reciprocal %114 {approx = true} : vector<32x1xf32> -> vector<32x1xf32>
    %116 = vector.broadcast %115 : vector<32x1xf32> to vector<32x32xf32>
    %117 = arith.mulf %110, %116 : vector<32x32xf32>
    %118 = vector.extract_strided_slice %88 {offsets = [0, 0], sizes = [32, 16], strides = [1, 1]} : vector<32x32xf32> to vector<32x16xf32>
    %cst_55 = arith.constant dense<0.000000e+00> : vector<32x16xf32>
    %119 = tpu.matmul %117, %118, %cst_55 {dimension_numbers = #tpu.dot_dimension_numbers<[1], [0], [0], [1], [0, 0, 1, 1], [], []>} : vector<32x32xf32>, vector<32x16xf32>, vector<32x16xf32> -> vector<32x16xf32>
    %c0_56 = arith.constant 0 : index
    %c0_57 = arith.constant 0 : index
    %120 = vector.load %arg11[%c0_56, %c0_57] : memref<32x32xf32, #tpu.memory_space<vmem>>, vector<32x16xf32>
    tpu.vector_store %arg11[%c0_56, %c0_57], %119 {strides = array<i32>} : memref<32x32xf32, #tpu.memory_space<vmem>>, vector<32x16xf32>,
    %121 = vector.extract_strided_slice %90 {offsets = [0, 3], sizes = [32, 1], strides = [1, 1]} : vector<32x4xf32> to vector<32x1xf32>
    %122 = vector.extract_strided_slice %90 {offsets = [0, 1], sizes = [32, 1], strides = [1, 1]} : vector<32x4xf32> to vector<32x1xf32>
    %123 = tpu.transpose %122, [1, 0] : vector<32x1xf32> -> vector<1x32xf32>
    %124 = vector.broadcast %121 : vector<32x1xf32> to vector<32x32xf32>
    %125 = vector.broadcast %123 : vector<1x32xf32> to vector<32x32xf32>
    %126 = arith.addf %124, %125 : vector<32x32xf32>
    %cst_58 = arith.constant 0.000000e+00 : f32
    %127 = vector.broadcast %cst_58 : f32 to vector<32x32xf32>
    %128 = arith.cmpf ogt, %126, %127 : vector<32x32xf32>
    %cst_59 = arith.constant 2.000000e-01 : f32
    %129 = vector.broadcast %cst_59 : f32 to vector<32x32xf32>
    %130 = arith.mulf %129, %126 : vector<32x32xf32>
    %131 = arith.select %128, %126, %130 : vector<32x32xi1>, vector<32x32xf32>
    %cst_60 = arith.constant -1.000000e+30 : f32
    %132 = vector.broadcast %cst_60 : f32 to vector<32x32xf32>
    %133 = arith.select %4, %131, %132 : vector<32x32xi1>, vector<32x32xf32>
    %cst_61 = arith.constant dense<0xFF800000> : vector<32xf32>
    %134 = vector.multi_reduction <maximumf>, %133, %cst_61 [1] : vector<32x32xf32> to vector<32xf32>
    %135 = vector.shape_cast %134 : vector<32xf32> to vector<32x1xf32>
    %136 = vector.broadcast %135 : vector<32x1xf32> to vector<32x32xf32>
    %137 = arith.subf %133, %136 : vector<32x32xf32>
    %138 = math.exp %137 : vector<32x32xf32>
    %cst_62 = arith.constant 0.000000e+00 : f32
    %139 = vector.broadcast %cst_62 : f32 to vector<32x32xf32>
    %140 = arith.select %4, %138, %139 : vector<32x32xi1>, vector<32x32xf32>
    %cst_63 = arith.constant dense<0.000000e+00> : vector<32xf32>
    %141 = vector.multi_reduction <add>, %140, %cst_63 [1] : vector<32x32xf32> to vector<32xf32>
    %142 = vector.shape_cast %141 : vector<32xf32> to vector<32x1xf32>
    %cst_64 = arith.constant 9.99999971E-10 : f32
    %143 = vector.broadcast %cst_64 : f32 to vector<32x1xf32>
    %144 = arith.maximumf %142, %143 : vector<32x1xf32>
    %145 = tpu.reciprocal %144 {approx = true} : vector<32x1xf32> -> vector<32x1xf32>
    %146 = vector.broadcast %145 : vector<32x1xf32> to vector<32x32xf32>
    %147 = arith.mulf %140, %146 : vector<32x32xf32>
    %148 = vector.extract_strided_slice %88 {offsets = [0, 16], sizes = [32, 16], strides = [1, 1]} : vector<32x32xf32> to vector<32x16xf32>
    %cst_65 = arith.constant dense<0.000000e+00> : vector<32x16xf32>
    %149 = tpu.matmul %147, %148, %cst_65 {dimension_numbers = #tpu.dot_dimension_numbers<[1], [0], [0], [1], [0, 0, 1, 1], [], []>} : vector<32x32xf32>, vector<32x16xf32>, vector<32x16xf32> -> vector<32x16xf32>
    %c0_66 = arith.constant 0 : index
    %c16 = arith.constant 16 : index
    %150 = vector.load %arg11[%c0_66, %c16] : memref<32x32xf32, #tpu.memory_space<vmem>>, vector<32x16xf32>
    tpu.vector_store %arg11[%c0_66, %c16], %149 {strides = array<i32>} : memref<32x32xf32, #tpu.memory_space<vmem>>, vector<32x16xf32>,
    %c0_67 = arith.constant 0 : index
    %c0_68 = arith.constant 0 : index
    %151 = vector.load %arg11[%c0_67, %c0_68] : memref<32x32xf32, #tpu.memory_space<vmem>>, vector<32x32xf32>
    %152 = arith.addf %151, %89 : vector<32x32xf32>
    %153 = vector.broadcast %86 : vector<1x32xf32> to vector<32x32xf32>
    %154 = arith.addf %152, %153 : vector<32x32xf32>
    %c0_69 = arith.constant 0 : index
    %c0_70 = arith.constant 0 : index
    %c0_71 = arith.constant 0 : index
    %155 = vector.load %arg9[%c0_69, %c0_70, %c0_71] : memref<1x32x32xf32, #tpu.memory_space<vmem>>, vector<1x32x32xf32>
    %156 = vector.shape_cast %155 : vector<1x32x32xf32> to vector<32x32xf32>
    %157 = vector.shape_cast %154 : vector<32x32xf32> to vector<1x32x32xf32>
    tpu.vector_store %arg9[%c0_69, %c0_70, %c0_71], %157 {strides = array<i32>} : memref<1x32x32xf32, #tpu.memory_space<vmem>>, vector<1x32x32xf32>,
    return
  }
  func.func @transform_0(%arg0: i32) -> (i32, i32) {
    %c0_i32 = arith.constant 0 : i32
    %c0_i32_0 = arith.constant 0 : i32
    %c0_i32_1 = arith.constant 0 : i32
    return %c0_i32, %c0_i32_0 : i32, i32
  }
  func.func @transform_1(%arg0: i32) -> (i32, i32, i32) {
    %c0_i32 = arith.constant 0 : i32
    %c0_i32_0 = arith.constant 0 : i32
    %c0_i32_1 = arith.constant 0 : i32
    return %arg0, %c0_i32, %c0_i32_0 : i32, i32, i32
  }
  func.func @transform_2(%arg0: i32) -> (i32, i32, i32) {
    %c0_i32 = arith.constant 0 : i32
    %c0_i32_0 = arith.constant 0 : i32
    %c0_i32_1 = arith.constant 0 : i32
    return %arg0, %c0_i32, %c0_i32_0 : i32, i32, i32
  }
  func.func @transform_3(%arg0: i32) -> (i32, i32, i32) {
    %c0_i32 = arith.constant 0 : i32
    %c0_i32_0 = arith.constant 0 : i32
    %c0_i32_1 = arith.constant 0 : i32
    return %arg0, %c0_i32, %c0_i32_0 : i32, i32, i32
  }
  func.func @transform_4(%arg0: i32) -> (i32, i32, i32) {
    %c0_i32 = arith.constant 0 : i32
    %c0_i32_0 = arith.constant 0 : i32
    %c0_i32_1 = arith.constant 0 : i32
    return %arg0, %c0_i32, %c0_i32_0 : i32, i32, i32
  }
  func.func @transform_5(%arg0: i32) -> (i32, i32, i32) {
    %c0_i32 = arith.constant 0 : i32
    %c0_i32_0 = arith.constant 0 : i32
    %c0_i32_1 = arith.constant 0 : i32
    return %arg0, %c0_i32, %c0_i32_0 : i32, i32, i32
  }
  func.func @transform_6(%arg0: i32) -> (i32, i32, i32) {
    %c0_i32 = arith.constant 0 : i32
    %c0_i32_0 = arith.constant 0 : i32
    %c0_i32_1 = arith.constant 0 : i32
    return %arg0, %c0_i32, %c0_i32_0 : i32, i32, i32
  }
  func.func @transform_7(%arg0: i32) -> (i32, i32, i32) {
    %c0_i32 = arith.constant 0 : i32
    %c0_i32_0 = arith.constant 0 : i32
    %c0_i32_1 = arith.constant 0 : i32
    return %arg0, %c0_i32, %c0_i32_0 : i32, i32, i32
  }
  func.func @transform_8(%arg0: i32) -> (i32, i32, i32) {
    %c0_i32 = arith.constant 0 : i32
    %c0_i32_0 = arith.constant 0 : i32
    %c0_i32_1 = arith.constant 0 : i32
    return %arg0, %c0_i32, %c0_i32_0 : i32, i32, i32
  }
}

</mosaic_0001>

<llo_original>
// kernel: tpu_custom_call.1
$region0: #{tpu_custom_call.1}
  #allocation0 [shape = 'u32[]', space=smem, size = 0x4, offset = 0x4, fixed_abs, tag = 'smem constant byte address 0x4 - core index']
  #allocation1 [shape = 'u32[144,128]{1,0:T(1,128)}', space=vmem, size = 0x12000, scoped, tag = 'internal scratch']
  #allocation2 [shape = 'f32[32,128]{1,0:T(8,128)}', space=vmem, size = 0x4000, scoped, tag = 'scratch operand']
  #allocation3 [shape = 'f32[32,32]{1,0:T(8,128)}', space=vmem, size = 0x4000, scoped, tag = 'scratch operand']
  %s0 = inlined_call_operand.vmem [shape: f32[32,14], index: 0, kind: input, shape index: {}]
  %s1 = inlined_call_operand.vmem [shape: f32[3,32,32], index: 1, kind: input, shape index: {}]
  %s2 = inlined_call_operand.vmem [shape: f32[3,14,256], index: 2, kind: input, shape index: {}]
  %s3 = inlined_call_operand.vmem [shape: f32[3,128,4], index: 3, kind: input, shape index: {}]
  %s4 = inlined_call_operand.vmem [shape: f32[3,1,128], index: 4, kind: input, shape index: {}]
  %s5 = inlined_call_operand.vmem [shape: f32[3,128,64], index: 5, kind: input, shape index: {}]
  %s6 = inlined_call_operand.vmem [shape: f32[3,32,4], index: 6, kind: input, shape index: {}]
  %s7 = inlined_call_operand.vmem [shape: f32[3,1,32], index: 7, kind: input, shape index: {}]
  %s8 = inlined_call_operand.hbm [shape: f32[3,32,32], index: 8, kind: output, shape index: {}]
  %s9 = sld [smem:[#allocation0]]
  $region65: #{tpu_custom_call.1} parent=0
    _
  %s11 = ssub.s32 1, %s9
  %s12 = scalar_select 0, %s11, %s9
  $region1: #{tpu_custom_call.1} parent=0
    #allocation4 [shape = 'u8[32768]{0}', space=vmem, size = 0x8000, scoped, tag = 'output window, operand 0']
    #allocation5 [shape = 's32[2]{0}', space=sflag, size = 0x8, scoped, tag = 'scoped memory for tpu_custom_call.1']
    %13 = vsyncpa [#allocation5], 0
    %s14 = scalar_lea.sflag [#allocation5], 1
    %15 = vsyncpa %s14, 0
    loop: start=0, step=1, limit=5
    $region2: #{tpu_custom_call.1} parent=1 // loop_pre_header
      _
    $region3: #{tpu_custom_call.1} parent=1 // loop_header
      %s17 = sphi 0, %s21
      %p18 = scmp.ge.s32.totalorder %s17, 5
      %s25 = sphi 0, %s25
      %s27 = sphi 0, %s25
      %s28 = sphi 0, %s27
      %s42 = sphi 0, %s28
      %s48 = sphi 0, %s50
      %s51 = sphi 0, %s48
      %s52 = sphi 0, %s51
      %s68 = sphi 0, %s52
      %s74 = sphi 0, %s76
      %s77 = sphi 0, %s74
      %s78 = sphi 0, %s77
      %s94 = sphi 0, %s78
      %s100 = sphi 0, %s102
      %s103 = sphi 0, %s100
      %s104 = sphi 0, %s103
      %s120 = sphi 0, %s104
      %s126 = sphi 0, %s128
      %s129 = sphi 0, %s126
      %s130 = sphi 0, %s129
      %s146 = sphi 0, %s130
      %s152 = sphi 0, %s154
      %s155 = sphi 0, %s152
      %s156 = sphi 0, %s155
      %s172 = sphi 0, %s156
      %s178 = sphi 0, %s180
      %s181 = sphi 0, %s178
      %s182 = sphi 0, %s181
      %s198 = sphi 0, %s182
      %s204 = sphi 0, %s206
      %s207 = sphi 0, %s204
      %s208 = sphi 0, %s207
      %s224 = sphi 0, %s208
      %s230 = sphi 0, %s232
      %s233 = sphi 0, %s230
      %s234 = sphi 0, %s233
      %s250 = sphi 0, %s234
    $region4: #{tpu_custom_call.1} parent=1 // loop_header_branch
      %20 = sbr.rel (%p18) target = $region8
    $region5: #{tpu_custom_call.1} parent=1 // loop_body
      %s22 = ssub.s32 %s17, 1
      %s23 = ssub.s32 %s17, 2
      %s24 = sadd.s32 %s17, 1
      %s26 = sadd.s32 %s25, 1
      %p29 = scmp.eq.s32.totalorder %s17, 2
      %p30 = scmp.ne.s32.totalorder %s25, %s27
      %p31 = scmp.eq.s32.totalorder %s17, 0
      %p32 = por %p30, %p31
      %p33 = scmp.ne.s32.totalorder %s25, %s27
      %p34 = scmp.eq.s32.totalorder %s22, 2
      %p35 = por %p33, %p34
      %p36 = scmp.ne.s32.totalorder %s27, %s28
      %p37 = scmp.eq.s32.totalorder %s22, 0
      %p38 = por %p36, %p37
      %p39 = scmp.ne.s32.totalorder %s27, %s28
      %p40 = scmp.eq.s32.totalorder %s23, 2
      %p41 = por %p39, %p40
      %p43 = scmp.ne.s32.totalorder %s28, %s42
      %p44 = scmp.eq.s32.totalorder %s23, 0
      %p45 = por %p43, %p44
      %s46 = ssub.s32 %s17, %s24
      %p47 = scmp.eq.s32.totalorder %s46, 0
      %s49 = sadd.s32 %s48, 1
      %s50 = scalar_select %p47, %s48, %s49
      %p53 = pneg %p47
      %p54 = scmp.eq.s32.totalorder %s17, 2
      %p55 = por %p53, %p54
      %p56 = scmp.ne.s32.totalorder %s48, %s51
      %p57 = scmp.eq.s32.totalorder %s17, 0
      %p58 = por %p56, %p57
      %p59 = scmp.ne.s32.totalorder %s48, %s51
      %p60 = scmp.eq.s32.totalorder %s22, 2
      %p61 = por %p59, %p60
      %p62 = scmp.ne.s32.totalorder %s51, %s52
      %p63 = scmp.eq.s32.totalorder %s22, 0
      %p64 = por %p62, %p63
      %p65 = scmp.ne.s32.totalorder %s51, %s52
      %p66 = scmp.eq.s32.totalorder %s23, 2
      %p67 = por %p65, %p66
      %p69 = scmp.ne.s32.totalorder %s52, %s68
      %p70 = scmp.eq.s32.totalorder %s23, 0
      %p71 = por %p69, %p70
      %s72 = ssub.s32 %s17, %s24
      %p73 = scmp.eq.s32.totalorder %s72, 0
      %s75 = sadd.s32 %s74, 1
      %s76 = scalar_select %p73, %s74, %s75
      %p79 = pneg %p73
      %p80 = scmp.eq.s32.totalorder %s17, 2
      %p81 = por %p79, %p80
      %p82 = scmp.ne.s32.totalorder %s74, %s77
      %p83 = scmp.eq.s32.totalorder %s17, 0
      %p84 = por %p82, %p83
      %p85 = scmp.ne.s32.totalorder %s74, %s77
      %p86 = scmp.eq.s32.totalorder %s22, 2
      %p87 = por %p85, %p86
      %p88 = scmp.ne.s32.totalorder %s77, %s78
      %p89 = scmp.eq.s32.totalorder %s22, 0
      %p90 = por %p88, %p89
      %p91 = scmp.ne.s32.totalorder %s77, %s78
      %p92 = scmp.eq.s32.totalorder %s23, 2
      %p93 = por %p91, %p92
      %p95 = scmp.ne.s32.totalorder %s78, %s94
      %p96 = scmp.eq.s32.totalorder %s23, 0
      %p97 = por %p95, %p96
      %s98 = ssub.s32 %s17, %s24
      %p99 = scmp.eq.s32.totalorder %s98, 0
      %s101 = sadd.s32 %s100, 1
      %s102 = scalar_select %p99, %s100, %s101
      %p105 = pneg %p99
      %p106 = scmp.eq.s32.totalorder %s17, 2
      %p107 = por %p105, %p106
      %p108 = scmp.ne.s32.totalorder %s100, %s103
      %p109 = scmp.eq.s32.totalorder %s17, 0
      %p110 = por %p108, %p109
      %p111 = scmp.ne.s32.totalorder %s100, %s103
      %p112 = scmp.eq.s32.totalorder %s22, 2
      %p113 = por %p111, %p112
      %p114 = scmp.ne.s32.totalorder %s103, %s104
      %p115 = scmp.eq.s32.totalorder %s22, 0
      %p116 = por %p114, %p115
      %p117 = scmp.ne.s32.totalorder %s103, %s104
      %p118 = scmp.eq.s32.totalorder %s23, 2
      %p119 = por %p117, %p118
      %p121 = scmp.ne.s32.totalorder %s104, %s120
      %p122 = scmp.eq.s32.totalorder %s23, 0
      %p123 = por %p121, %p122
      %s124 = ssub.s32 %s17, %s24
      %p125 = scmp.eq.s32.totalorder %s124, 0
      %s127 = sadd.s32 %s126, 1
      %s128 = scalar_select %p125, %s126, %s127
      %p131 = pneg %p125
      %p132 = scmp.eq.s32.totalorder %s17, 2
      %p133 = por %p131, %p132
      %p134 = scmp.ne.s32.totalorder %s126, %s129
      %p135 = scmp.eq.s32.totalorder %s17, 0
      %p136 = por %p134, %p135
      %p137 = scmp.ne.s32.totalorder %s126, %s129
      %p138 = scmp.eq.s32.totalorder %s22, 2
      %p139 = por %p137, %p138
      %p140 = scmp.ne.s32.totalorder %s129, %s130
      %p141 = scmp.eq.s32.totalorder %s22, 0
      %p142 = por %p140, %p141
      %p143 = scmp.ne.s32.totalorder %s129, %s130
      %p144 = scmp.eq.s32.totalorder %s23, 2
      %p145 = por %p143, %p144
      %p147 = scmp.ne.s32.totalorder %s130, %s146
      %p148 = scmp.eq.s32.totalorder %s23, 0
      %p149 = por %p147, %p148
      %s150 = ssub.s32 %s17, %s24
      %p151 = scmp.eq.s32.totalorder %s150, 0
      %s153 = sadd.s32 %s152, 1
      %s154 = scalar_select %p151, %s152, %s153
      %p157 = pneg %p151
      %p158 = scmp.eq.s32.totalorder %s17, 2
      %p159 = por %p157, %p158
      %p160 = scmp.ne.s32.totalorder %s152, %s155
      %p161 = scmp.eq.s32.totalorder %s17, 0
      %p162 = por %p160, %p161
      %p163 = scmp.ne.s32.totalorder %s152, %s155
      %p164 = scmp.eq.s32.totalorder %s22, 2
      %p165 = por %p163, %p164
      %p166 = scmp.ne.s32.totalorder %s155, %s156
      %p167 = scmp.eq.s32.totalorder %s22, 0
      %p168 = por %p166, %p167
      %p169 = scmp.ne.s32.totalorder %s155, %s156
      %p170 = scmp.eq.s32.totalorder %s23, 2
      %p171 = por %p169, %p170
      %p173 = scmp.ne.s32.totalorder %s156, %s172
      %p174 = scmp.eq.s32.totalorder %s23, 0
      %p175 = por %p173, %p174
      %s176 = ssub.s32 %s17, %s24
      %p177 = scmp.eq.s32.totalorder %s176, 0
      %s179 = sadd.s32 %s178, 1
      %s180 = scalar_select %p177, %s178, %s179
      %p183 = pneg %p177
      %p184 = scmp.eq.s32.totalorder %s17, 2
      %p185 = por %p183, %p184
      %p186 = scmp.ne.s32.totalorder %s178, %s181
      %p187 = scmp.eq.s32.totalorder %s17, 0
      %p188 = por %p186, %p187
      %p189 = scmp.ne.s32.totalorder %s178, %s181
      %p190 = scmp.eq.s32.totalorder %s22, 2
      %p191 = por %p189, %p190
      %p192 = scmp.ne.s32.totalorder %s181, %s182
      %p193 = scmp.eq.s32.totalorder %s22, 0
      %p194 = por %p192, %p193
      %p195 = scmp.ne.s32.totalorder %s181, %s182
      %p196 = scmp.eq.s32.totalorder %s23, 2
      %p197 = por %p195, %p196
      %p199 = scmp.ne.s32.totalorder %s182, %s198
      %p200 = scmp.eq.s32.totalorder %s23, 0
      %p201 = por %p199, %p200
      %s202 = ssub.s32 %s17, %s24
      %p203 = scmp.eq.s32.totalorder %s202, 0
      %s205 = sadd.s32 %s204, 1
      %s206 = scalar_select %p203, %s204, %s205
      %p209 = pneg %p203
      %p210 = scmp.eq.s32.totalorder %s17, 2
      %p211 = por %p209, %p210
      %p212 = scmp.ne.s32.totalorder %s204, %s207
      %p213 = scmp.eq.s32.totalorder %s17, 0
      %p214 = por %p212, %p213
      %p215 = scmp.ne.s32.totalorder %s204, %s207
      %p216 = scmp.eq.s32.totalorder %s22, 2
      %p217 = por %p215, %p216
      %p218 = scmp.ne.s32.totalorder %s207, %s208
      %p219 = scmp.eq.s32.totalorder %s22, 0
      %p220 = por %p218, %p219
      %p221 = scmp.ne.s32.totalorder %s207, %s208
      %p222 = scmp.eq.s32.totalorder %s23, 2
      %p223 = por %p221, %p222
      %p225 = scmp.ne.s32.totalorder %s208, %s224
      %p226 = scmp.eq.s32.totalorder %s23, 0
      %p227 = por %p225, %p226
      %s228 = ssub.s32 %s17, %s24
      %p229 = scmp.eq.s32.totalorder %s228, 0
      %s231 = sadd.s32 %s230, 1
      %s232 = scalar_select %p229, %s230, %s231
      %p235 = pneg %p229
      %p236 = scmp.eq.s32.totalorder %s17, 2
      %p237 = por %p235, %p236
      %p238 = scmp.ne.s32.totalorder %s230, %s233
      %p239 = scmp.eq.s32.totalorder %s17, 0
      %p240 = por %p238, %p239
      %p241 = scmp.ne.s32.totalorder %s230, %s233
      %p242 = scmp.eq.s32.totalorder %s22, 2
      %p243 = por %p241, %p242
      %p244 = scmp.ne.s32.totalorder %s233, %s234
      %p245 = scmp.eq.s32.totalorder %s22, 0
      %p246 = por %p244, %p245
      %p247 = scmp.ne.s32.totalorder %s233, %s234
      %p248 = scmp.eq.s32.totalorder %s23, 2
      %p249 = por %p247, %p248
      %p251 = scmp.ne.s32.totalorder %s234, %s250
      %p252 = scmp.eq.s32.totalorder %s23, 0
      %p253 = por %p251, %p252
      %p254 = scmp.le.s32.totalorder 1, %s17
      %p255 = scmp.lt.s32.totalorder %s17, 4
      %p256 = pnand %p254, %p255
      %p257 = pneg %p256
      // Predicated region
      $region9: #{tpu_custom_call.1} parent=5 // pred_check
        _
      $region10: #{tpu_custom_call.1} parent=5 // pred_check_branch
        %259 = sbr.rel (%p256) target = $region12
      $region11: #{tpu_custom_call.1} parent=5 // pred_region
        %s260 = ssub.s32 %s17, 1
        // Predicated region
        $region13: #{tpu_custom_call.1} parent=11 // pred_check
          %p261 = pneg %p38
        $region14: #{tpu_custom_call.1} parent=11 // pred_check_branch
          %263 = sbr.rel (%p261) target = $region16
        $region15: #{tpu_custom_call.1} parent=11 // pred_region
          _
        $region16: #{tpu_custom_call.1} parent=11 // pred_fallthru
          _
      $region12: #{tpu_custom_call.1} parent=5 // pred_fallthru
        _
      %p264 = scmp.lt.s32.totalorder %s17, 3
      // Predicated region
      $region17: #{tpu_custom_call.1} parent=5 // pred_check
        %p265 = pneg %p264
      $region18: #{tpu_custom_call.1} parent=5 // pred_check_branch
        %267 = sbr.rel (%p265) target = $region20
      $region19: #{tpu_custom_call.1} parent=5 // pred_region
        // Predicated region
        $region21: #{tpu_custom_call.1} parent=19 // pred_check
          %p268 = pneg %p58
        $region22: #{tpu_custom_call.1} parent=19 // pred_check_branch
          %270 = sbr.rel (%p268) target = $region24
        $region23: #{tpu_custom_call.1} parent=19 // pred_region
          %p271 = scmp.lt.s32.totalorder %s17, 2
          %s272 = scalar_select %p271, %s17, 2
          %s273 = smul.addr %s272, 4
          %s274 = smul.addr %s273, 8
          %s275 = scalar_lea.vmem %s1, %s274
        $region24: #{tpu_custom_call.1} parent=19 // pred_fallthru
          _
        // Predicated region
        $region25: #{tpu_custom_call.1} parent=19 // pred_check
          %p276 = pneg %p84
        $region26: #{tpu_custom_call.1} parent=19 // pred_check_branch
          %278 = sbr.rel (%p276) target = $region28
        $region27: #{tpu_custom_call.1} parent=19 // pred_region
          %p279 = scmp.lt.s32.totalorder %s17, 2
          %s280 = scalar_select %p279, %s17, 2
          %s281 = smul.addr %s280, 4
          %s282 = smul.addr %s281, 8
          %s283 = scalar_lea.vmem %s2, %s282
        $region28: #{tpu_custom_call.1} parent=19 // pred_fallthru
          _
        // Predicated region
        $region29: #{tpu_custom_call.1} parent=19 // pred_check
          %p284 = pneg %p110
        $region30: #{tpu_custom_call.1} parent=19 // pred_check_branch
          %286 = sbr.rel (%p284) target = $region32
        $region31: #{tpu_custom_call.1} parent=19 // pred_region
          %p287 = scmp.lt.s32.totalorder %s17, 2
          %s288 = scalar_select %p287, %s17, 2
          %s289 = smul.addr %s288, 16
          %s290 = smul.addr %s289, 8
          %s291 = scalar_lea.vmem %s3, %s290
        $region32: #{tpu_custom_call.1} parent=19 // pred_fallthru
          _
        // Predicated region
        $region33: #{tpu_custom_call.1} parent=19 // pred_check
          %p292 = pneg %p136
        $region34: #{tpu_custom_call.1} parent=19 // pred_check_branch
          %294 = sbr.rel (%p292) target = $region36
        $region35: #{tpu_custom_call.1} parent=19 // pred_region
          %p295 = scmp.lt.s32.totalorder %s17, 2
          %s296 = scalar_select %p295, %s17, 2
          %s297 = scalar_lea.vmem %s4, %s296
        $region36: #{tpu_custom_call.1} parent=19 // pred_fallthru
          _
        // Predicated region
        $region37: #{tpu_custom_call.1} parent=19 // pred_check
          %p298 = pneg %p162
        $region38: #{tpu_custom_call.1} parent=19 // pred_check_branch
          %300 = sbr.rel (%p298) target = $region40
        $region39: #{tpu_custom_call.1} parent=19 // pred_region
          %p301 = scmp.lt.s32.totalorder %s17, 2
          %s302 = scalar_select %p301, %s17, 2
          %s303 = smul.addr %s302, 16
          %s304 = smul.addr %s303, 8
          %s305 = scalar_lea.vmem %s5, %s304
        $region40: #{tpu_custom_call.1} parent=19 // pred_fallthru
          _
        // Predicated region
        $region41: #{tpu_custom_call.1} parent=19 // pred_check
          %p306 = pneg %p188
        $region42: #{tpu_custom_call.1} parent=19 // pred_check_branch
          %308 = sbr.rel (%p306) target = $region44
        $region43: #{tpu_custom_call.1} parent=19 // pred_region
          %p309 = scmp.lt.s32.totalorder %s17, 2
          %s310 = scalar_select %p309, %s17, 2
          %s311 = smul.addr %s310, 4
          %s312 = smul.addr %s311, 8
          %s313 = scalar_lea.vmem %s6, %s312
        $region44: #{tpu_custom_call.1} parent=19 // pred_fallthru
          _
        // Predicated region
        $region45: #{tpu_custom_call.1} parent=19 // pred_check
          %p314 = pneg %p214
        $region46: #{tpu_custom_call.1} parent=19 // pred_check_branch
          %316 = sbr.rel (%p314) target = $region48
        $region47: #{tpu_custom_call.1} parent=19 // pred_region
          %p317 = scmp.lt.s32.totalorder %s17, 2
          %s318 = scalar_select %p317, %s17, 2
          %s319 = scalar_lea.vmem %s7, %s318
        $region48: #{tpu_custom_call.1} parent=19 // pred_fallthru
          _
      $region20: #{tpu_custom_call.1} parent=5 // pred_fallthru
        _
      %p320 = scmp.le.s32.totalorder 1, %s17
      %p321 = scmp.lt.s32.totalorder %s17, 4
      %p322 = pnand %p320, %p321
      %p323 = pneg %p322
      // Predicated region
      $region49: #{tpu_custom_call.1} parent=5 // pred_check
        _
      $region50: #{tpu_custom_call.1} parent=5 // pred_check_branch
        %325 = sbr.rel (%p322) target = $region52
      $region51: #{tpu_custom_call.1} parent=5 // pred_region
        %s326 = ssub.s32 %s17, 1
        %p327 = pneg %p38
        %p328 = pneg %p35
        %p329 = scmp.lt.s32.totalorder %s22, 2
        %s330 = scalar_select %p329, %s22, 2
        %s331 = smul.addr %s330, 4
        %s332 = smul.addr %s331, 8
        %s333 = scalar_lea.vmem %s1, %s332
        %p334 = pneg %p64
        %p335 = pneg %p61
        %p336 = scmp.lt.s32.totalorder %s22, 2
        %s337 = scalar_select %p336, %s22, 2
        %s338 = smul.addr %s337, 4
        %s339 = smul.addr %s338, 8
        %s340 = scalar_lea.vmem %s2, %s339
        %p341 = pneg %p90
        %p342 = pneg %p87
        %p343 = scmp.lt.s32.totalorder %s22, 2
        %s344 = scalar_select %p343, %s22, 2
        %s345 = smul.addr %s344, 16
        %s346 = smul.addr %s345, 8
        %s347 = scalar_lea.vmem %s3, %s346
        %p348 = pneg %p116
        %p349 = pneg %p113
        %p350 = scmp.lt.s32.totalorder %s22, 2
        %s351 = scalar_select %p350, %s22, 2
        %s352 = scalar_lea.vmem %s4, %s351
        %p353 = pneg %p142
        %p354 = pneg %p139
        %p355 = scmp.lt.s32.totalorder %s22, 2
        %s356 = scalar_select %p355, %s22, 2
        %s357 = smul.addr %s356, 16
        %s358 = smul.addr %s357, 8
        %s359 = scalar_lea.vmem %s5, %s358
        %p360 = pneg %p168
        %p361 = pneg %p165
        %p362 = scmp.lt.s32.totalorder %s22, 2
        %s363 = scalar_select %p362, %s22, 2
        %s364 = smul.addr %s363, 4
        %s365 = smul.addr %s364, 8
        %s366 = scalar_lea.vmem %s6, %s365
        %p367 = pneg %p194
        %p368 = pneg %p191
        %p369 = scmp.lt.s32.totalorder %s22, 2
        %s370 = scalar_select %p369, %s22, 2
        %s371 = scalar_lea.vmem %s7, %s370
        %p372 = pneg %p220
        %p373 = pneg %p217
        %p374 = pneg %p246
        %p375 = pneg %p243
        %s376 = sand.u32 %s233, 1
        %s377 = scalar_lea.sflag [#allocation5], %s376
        %s378 = sand.u32 %s233, 1
        %s379 = smul.addr %s378, 32
        %s380 = scalar_lea.vmem [#allocation4], %s379
        %p381 = scmp.lt.s32.totalorder %s22, 2
        %s382 = scalar_select %p381, %s22, 2
        %s383 = smul.addr %s382, 4
        %s384 = smul.addr %s383, 8
        %s385 = scalar_lea.vmem %s1, %s384
        %p386 = scmp.lt.s32.totalorder %s22, 2
        %s387 = scalar_select %p386, %s22, 2
        %s388 = smul.addr %s387, 4
        %s389 = smul.addr %s388, 8
        %s390 = scalar_lea.vmem %s2, %s389
        %p391 = scmp.lt.s32.totalorder %s22, 2
        %s392 = scalar_select %p391, %s22, 2
        %s393 = smul.addr %s392, 16
        %s394 = smul.addr %s393, 8
        %s395 = scalar_lea.vmem %s3, %s394
        %p396 = scmp.lt.s32.totalorder %s22, 2
        %s397 = scalar_select %p396, %s22, 2
        %s398 = scalar_lea.vmem %s4, %s397
        %p399 = scmp.lt.s32.totalorder %s22, 2
        %s400 = scalar_select %p399, %s22, 2
        %s401 = smul.addr %s400, 16
        %s402 = smul.addr %s401, 8
        %s403 = scalar_lea.vmem %s5, %s402
        %p404 = scmp.lt.s32.totalorder %s22, 2
        %s405 = scalar_select %p404, %s22, 2
        %s406 = smul.addr %s405, 4
        %s407 = smul.addr %s406, 8
        %s408 = scalar_lea.vmem %s6, %s407
        %p409 = scmp.lt.s32.totalorder %s22, 2
        %s410 = scalar_select %p409, %s22, 2
        %s411 = scalar_lea.vmem %s7, %s410
        %v412 = vld [vmem:[%s0] sm:$0xff]
        %v413 = vld [vmem:[%s0 + $0x8] sm:$0xff]
        %v414 = vld [vmem:[%s0 + $0x10] sm:$0xff]
        %v415 = vld [vmem:[%s0 + $0x18] sm:$0xff]
        %v416 = vld [vmem:[%s385] sm:$0xff]
        %v417 = vld [vmem:[%s385 + $0x8] sm:$0xff]
        %v418 = vld [vmem:[%s385 + $0x10] sm:$0xff]
        %v419 = vld [vmem:[%s385 + $0x18] sm:$0xff]
        %vm420 = vcmp.gt.f32.partialorder %v416, 0.0
        %vm421 = vcmp.gt.f32.partialorder %v417, 0.0
        %vm422 = vcmp.gt.f32.partialorder %v418, 0.0
        %vm423 = vcmp.gt.f32.partialorder %v419, 0.0
        %v424 = vld [vmem:[%s390] sm:$0xff]
        %v425 = vld [vmem:[%s390 + $0x8] sm:$0xff]
        %v426 = vld [vmem:[%s390 + $0x10] sm:$0x3f]
        %v427 = vld [vmem:[%s390 + $0x18] sm:$0x3f]
        %v428 = vld [vmem:[%s395] sm:$0xff]
        %v429 = vld [vmem:[%s395 + $0x8] sm:$0xff]
        %v430 = vld [vmem:[%s395 + $0x10] sm:$0xff]
        %v431 = vld [vmem:[%s395 + $0x18] sm:$0xff]
        %v432 = vld [vmem:[%s395 + $0x20] sm:$0xff]
        %v433 = vld [vmem:[%s395 + $0x28] sm:$0xff]
        %v434 = vld [vmem:[%s395 + $0x30] sm:$0xff]
        %v435 = vld [vmem:[%s395 + $0x38] sm:$0xff]
        %v436 = vld [vmem:[%s395 + $0x40] sm:$0xff]
        %v437 = vld [vmem:[%s395 + $0x48] sm:$0xff]
        %v438 = vld [vmem:[%s395 + $0x50] sm:$0xff]
        %v439 = vld [vmem:[%s395 + $0x58] sm:$0xff]
        %v440 = vld [vmem:[%s395 + $0x60] sm:$0xff]
        %v441 = vld [vmem:[%s395 + $0x68] sm:$0xff]
        %v442 = vld [vmem:[%s395 + $0x70] sm:$0xff]
        %v443 = vld [vmem:[%s395 + $0x78] sm:$0xff]
        %v444 = vld [vmem:[%s398] sm:$0x1]
        %vm445 = vcmask 113664
        %v447 = vsel %vm445, %v412, 0
        %v450 = vsel %vm445, %v413, 0
        %v453 = vsel %vm445, %v414, 0
        %v456 = vsel %vm445, %v415, 0
        %vm458 = vcmask 1045504
        %v460 = vsel %vm458, %v426, 0
        %v463 = vsel %vm458, %v427, 0
        %465 = vmatprep.subr.mxu0 %v425
        %466 = vmatpush1.msra.mxu0 %v424
        %467 = vmatprep.subr.mxu0 %v463
        %468 = vmatpush1.msra.mxu0 %v460
        %469 = vmatprep.subr.mxu0 0.0
        %470 = vmatpush1.msra.mxu0 0.0
        %471 = vmatprep.subr.mxu0 0.0
        %472 = vmatpush1.msra.mxu0 0.0
        %473 = vmatprep.subr.mxu0 0.0
        %474 = vmatpush1.msra.mxu0 0.0
        %475 = vmatprep.subr.mxu0 0.0
        %476 = vmatpush1.msra.mxu0 0.0
        %477 = vmatprep.subr.mxu0 0.0
        %478 = vmatpush1.msra.mxu0 0.0
        %479 = vmatprep.subr.mxu0 0.0
        %480 = vmatpush1.msra.mxu0 0.0
        %481 = vmatprep.subr.mxu0 0.0
        %482 = vmatpush1.msra.mxu0 0.0
        %483 = vmatprep.subr.mxu0 0.0
        %484 = vmatpush1.msra.mxu0 0.0
        %485 = vmatprep.subr.mxu0 0.0
        %486 = vmatpush1.msra.mxu0 0.0
        %487 = vmatprep.subr.mxu0 0.0
        %488 = vmatpush1.msra.mxu0 0.0
        %489 = vmatprep.subr.mxu0 0.0
        %490 = vmatpush1.msra.mxu0 0.0
        %491 = vmatprep.subr.mxu0 0.0
        %492 = vmatpush1.msra.mxu0 0.0
        %493 = vmatprep.subr.mxu0 0.0
        %494 = vmatpush1.msra.mxu0 0.0
        %495 = vmatprep.subr.mxu0 0.0
        %496 = vmatpush1.msra.mxu0 0.0
        %497 = vmatprep.subr.mxu0 0.0
        %498 = vmatpush1.msra.mxu0 0.0
        %499 = vmatprep.subr.mxu0 0.0
        %500 = vmatpush1.msra.mxu0 0.0
        %501 = vmatprep.subr.mxu0 0.0
        %502 = vmatpush1.msra.mxu0 0.0
        %503 = vmatprep.subr.mxu0 0.0
        %504 = vmatpush1.msra.mxu0 0.0
        %505 = vmatprep.subr.mxu0 0.0
        %506 = vmatpush1.msra.mxu0 0.0
        %507 = vmatprep.subr.mxu0 0.0
        %508 = vmatpush1.msra.mxu0 0.0
        %509 = vmatprep.subr.mxu0 0.0
        %510 = vmatpush1.msra.mxu0 0.0
        %511 = vmatprep.subr.mxu0 0.0
        %512 = vmatpush1.msra.mxu0 0.0
        %513 = vmatprep.subr.mxu0 0.0
        %514 = vmatpush1.msra.mxu0 0.0
        %515 = vmatprep.subr.mxu0 0.0
        %516 = vmatpush1.msra.mxu0 0.0
        %517 = vmatprep.subr.mxu0 0.0
        %518 = vmatpush1.msra.mxu0 0.0
        %519 = vmatprep.subr.mxu0 0.0
        %520 = vmatpush1.msra.mxu0 0.0
        %521 = vmatprep.subr.mxu0 0.0
        %522 = vmatpush1.msra.mxu0 0.0
        %523 = vmatprep.subr.mxu0 0.0
        %524 = vmatpush1.msra.mxu0 0.0
        %525 = vmatprep.subr.mxu0 0.0
        %526 = vmatpush1.msra.mxu0 0.0
        %527 = vmatprep.subr.mxu0 0.0
        %528 = vmatpush1.msra.mxu0 0.0
        %529 = vmatprep.mubr.f32.mxu0 0.0
        %530 = vmatmul.mubr.f32.gmra.mrb[0].mxu0 %v447
        %v531 = vpop.f32.mrb[0].mxu0
        %v532 = vadd.f32 0.0, %v531
        %v533 = vpop.f32.mrb[0].mxu0
        %v534 = vadd.f32 0.0, %v533
        %535 = vmatprep.mubr.f32.mxu0 0.0
        %536 = vmatmul.mubr.f32.gmra.mrb[0].mxu0 %v450
        %v537 = vpop.f32.mrb[0].mxu0
        %v538 = vadd.f32 0.0, %v537
        %v539 = vpop.f32.mrb[0].mxu0
        %v540 = vadd.f32 0.0, %v539
        %541 = vmatprep.mubr.f32.mxu0 0.0
        %542 = vmatmul.mubr.f32.gmra.mrb[0].mxu0 %v453
        %v543 = vpop.f32.mrb[0].mxu0
        %v544 = vadd.f32 0.0, %v543
        %v545 = vpop.f32.mrb[0].mxu0
        %v546 = vadd.f32 0.0, %v545
        %547 = vmatprep.mubr.f32.mxu0 0.0
        %548 = vmatmul.mubr.f32.gmra.mrb[0].mxu0 %v456
        %v549 = vpop.f32.mrb[0].mxu0
        %v550 = vadd.f32 0.0, %v549
        %v551 = vpop.f32.mrb[0].mxu0
        %v552 = vadd.f32 0.0, %v551
        %553 = vdwg.mxu0
        %554 = vmatprep.subr.mxu0 0.0
        %555 = vmatpush1.msra.mxu0 %v428
        %556 = vmatprep.subr.mxu0 0.0
        %557 = vmatpush1.msra.mxu0 %v429
        %558 = vmatprep.subr.mxu0 0.0
        %559 = vmatpush1.msra.mxu0 %v430
        %560 = vmatprep.subr.mxu0 0.0
        %561 = vmatpush1.msra.mxu0 %v431
        %562 = vmatprep.subr.mxu0 0.0
        %563 = vmatpush1.msra.mxu0 %v432
        %564 = vmatprep.subr.mxu0 0.0
        %565 = vmatpush1.msra.mxu0 %v433
        %566 = vmatprep.subr.mxu0 0.0
        %567 = vmatpush1.msra.mxu0 %v434
        %568 = vmatprep.subr.mxu0 0.0
        %569 = vmatpush1.msra.mxu0 %v435
        %570 = vmatprep.subr.mxu0 0.0
        %571 = vmatpush1.msra.mxu0 %v436
        %572 = vmatprep.subr.mxu0 0.0
        %573 = vmatpush1.msra.mxu0 %v437
        %574 = vmatprep.subr.mxu0 0.0
        %575 = vmatpush1.msra.mxu0 %v438
        %576 = vmatprep.subr.mxu0 0.0
        %577 = vmatpush1.msra.mxu0 %v439
        %578 = vmatprep.subr.mxu0 0.0
        %579 = vmatpush1.msra.mxu0 %v440
        %580 = vmatprep.subr.mxu0 0.0
        %581 = vmatpush1.msra.mxu0 %v441
        %582 = vmatprep.subr.mxu0 0.0
        %583 = vmatpush1.msra.mxu0 %v442
        %584 = vmatprep.subr.mxu0 0.0
        %585 = vmatpush1.msra.mxu0 %v443
        %586 = vmatprep.subr.mxu0 0.0
        %587 = vmatpush1.msra.mxu0 0.0
        %588 = vmatprep.subr.mxu0 0.0
        %589 = vmatpush1.msra.mxu0 0.0
        %590 = vmatprep.subr.mxu0 0.0
        %591 = vmatpush1.msra.mxu0 0.0
        %592 = vmatprep.subr.mxu0 0.0
        %593 = vmatpush1.msra.mxu0 0.0
        %594 = vmatprep.subr.mxu0 0.0
        %595 = vmatpush1.msra.mxu0 0.0
        %596 = vmatprep.subr.mxu0 0.0
        %597 = vmatpush1.msra.mxu0 0.0
        %598 = vmatprep.subr.mxu0 0.0
        %599 = vmatpush1.msra.mxu0 0.0
        %600 = vmatprep.subr.mxu0 0.0
        %601 = vmatpush1.msra.mxu0 0.0
        %602 = vmatprep.subr.mxu0 0.0
        %603 = vmatpush1.msra.mxu0 0.0
        %604 = vmatprep.subr.mxu0 0.0
        %605 = vmatpush1.msra.mxu0 0.0
        %606 = vmatprep.subr.mxu0 0.0
        %607 = vmatpush1.msra.mxu0 0.0
        %608 = vmatprep.subr.mxu0 0.0
        %609 = vmatpush1.msra.mxu0 0.0
        %610 = vmatprep.subr.mxu0 0.0
        %611 = vmatpush1.msra.mxu0 0.0
        %612 = vmatprep.subr.mxu0 0.0
        %613 = vmatpush1.msra.mxu0 0.0
        %614 = vmatprep.subr.mxu0 0.0
        %615 = vmatpush1.msra.mxu0 0.0
        %616 = vmatprep.subr.mxu0 0.0
        %617 = vmatpush1.msra.mxu0 0.0
        %618 = vmatprep.mubr.f32.mxu0 0.0
        %619 = vmatmul.mubr.f32.gmra.mrb[0].mxu0 %v532
        %v620 = vpop.f32.mrb[0].mxu0
        %v621 = vadd.f32 0.0, %v620
        %v622 = vpop.f32.mrb[0].mxu0
        %623 = vmatprep.mubr.f32.mxu0 0.0
        %624 = vmatmul.mubr.f32.gmra.mrb[0].mxu0 %v538
        %v625 = vpop.f32.mrb[0].mxu0
        %v626 = vadd.f32 0.0, %v625
        %v627 = vpop.f32.mrb[0].mxu0
        %628 = vmatprep.mubr.f32.mxu0 0.0
        %629 = vmatmul.mubr.f32.gmra.mrb[0].mxu0 %v544
        %v630 = vpop.f32.mrb[0].mxu0
        %v631 = vadd.f32 0.0, %v630
        %v632 = vpop.f32.mrb[0].mxu0
        %633 = vmatprep.mubr.f32.mxu0 0.0
        %634 = vmatmul.mubr.f32.gmra.mrb[0].mxu0 %v550
        %v635 = vpop.f32.mrb[0].mxu0
        %v636 = vadd.f32 0.0, %v635
        %v637 = vpop.f32.mrb[0].mxu0
        %638 = vdwg.mxu0
        %639 = vxpose.xlu0.b32.start [1/16] %v621, 128
        %640 = vxpose.xlu0.b32.cont [2/16] %v626, 128
        %641 = vxpose.xlu0.b32.cont [3/16] %v631, 128
        %642 = vxpose.xlu0.b32.cont [4/16] %v636, 128
        %643 = vxpose.xlu0.b32.cont [5/16] 0.0, 128
        %644 = vxpose.xlu0.b32.cont [6/16] 0.0, 128
        %645 = vxpose.xlu0.b32.cont [7/16] 0.0, 128
        %646 = vxpose.xlu0.b32.cont [8/16] 0.0, 128
        %647 = vxpose.xlu0.b32.cont [9/16] 0.0, 128
        %648 = vxpose.xlu0.b32.cont [10/16] 0.0, 128
        %649 = vxpose.xlu0.b32.cont [11/16] 0.0, 128
        %650 = vxpose.xlu0.b32.cont [12/16] 0.0, 128
        %651 = vxpose.xlu0.b32.cont [13/16] 0.0, 128
        %652 = vxpose.xlu0.b32.cont [14/16] 0.0, 128
        %653 = vxpose.xlu0.b32.cont [15/16] 0.0, 128
        %654 = vxpose.xlu0.b32.end [16/16] 0.0, 128
        %v655 = vpop.trf.xlu0
        %v656 = vpop.trf.xlu0
        %v657 = vpop.trf.xlu0
        %v658 = vpop.trf.xlu0
        %v659 = vpop.trf.xlu0
        %v660 = vpop.trf.xlu0
        %v661 = vpop.trf.xlu0
        %v662 = vpop.trf.xlu0
        %v663 = vpop.trf.xlu0
        %v664 = vpop.trf.xlu0
        %v665 = vpop.trf.xlu0
        %v666 = vpop.trf.xlu0
        %v667 = vpop.trf.xlu0
        %v668 = vpop.trf.xlu0
        %v669 = vpop.trf.xlu0
        %v670 = vpop.trf.xlu0
        %672 = vset.pattern.permute.xlu0 2
        %673 = vperm.xlu0 %672, %v621
        %v674 = vpop.permute.xlu0 %673
        %677 = vset.pattern.permute.xlu0 2
        %678 = vperm.xlu0 %677, %v626
        %v679 = vpop.permute.xlu0 %678
        %682 = vset.pattern.permute.xlu0 2
        %683 = vperm.xlu0 %682, %v631
        %v684 = vpop.permute.xlu0 %683
        %687 = vset.pattern.permute.xlu0 2
        %688 = vperm.xlu0 %687, %v636
        %v689 = vpop.permute.xlu0 %688
        %v691 = vlaneseq
        %v692 = vshrl.u32 %v691, 7
        %v693 = vsub.s32 0, %v692
        %v694 = vrot.slane %v655, %v693
        %v695 = vadd.f32 %v674, %v694
        %v696 = vadd.f32 %v679, %v694
        %v697 = vadd.f32 %v684, %v694
        %v698 = vadd.f32 %v689, %v694
        %vm699 = vcmp.gt.f32.partialorder %v695, 0.0
        %vm700 = vcmp.gt.f32.partialorder %v696, 0.0
        %vm701 = vcmp.gt.f32.partialorder %v697, 0.0
        %vm702 = vcmp.gt.f32.partialorder %v698, 0.0
        %v703 = vmul.f32 %v695, 0.2
        %v704 = vmul.f32 %v696, 0.2
        %v705 = vmul.f32 %v697, 0.2
        %v706 = vmul.f32 %v698, 0.2
        %v707 = vsel %vm699, %v695, %v703
        %v708 = vsel %vm700, %v696, %v704
        %v709 = vsel %vm701, %v697, %v705
        %v710 = vsel %vm702, %v698, %v706
        %v711 = vsel %vm420, %v707, -1e+30
        %v712 = vsel %vm421, %v708, -1e+30
        %v713 = vsel %vm422, %v709, -1e+30
        %v714 = vsel %vm423, %v710, -1e+30
        %vm715 = vcmask 261120
        %v716 = vsel %vm715, %v711, -inf
        %717 = vmax.xlane.f32.xlu0 %v716
        %v718 = vpop.xlane.xlu0 %717
        %v719 = vsel %vm715, %v712, -inf
        %720 = vmax.xlane.f32.xlu0 %v719
        %v721 = vpop.xlane.xlu0 %720
        %v722 = vsel %vm715, %v713, -inf
        %723 = vmax.xlane.f32.xlu0 %v722
        %v724 = vpop.xlane.xlu0 %723
        %v725 = vsel %vm715, %v714, -inf
        %726 = vmax.xlane.f32.xlu0 %v725
        %v727 = vpop.xlane.xlu0 %726
        %v728 = vsub.f32 %v711, %v718
        %v729 = vsub.f32 %v712, %v721
        %v730 = vsub.f32 %v713, %v724
        %v731 = vsub.f32 %v714, %v727
        %v732 = vmul.f32 %v728, 1.442695
        %v733 = vpow.pop %v732
        %v734 = vmul.f32 %v729, 1.442695
        %v735 = vpow.pop %v734
        %v736 = vmul.f32 %v730, 1.442695
        %v737 = vpow.pop %v736
        %v738 = vmul.f32 %v731, 1.442695
        %v739 = vpow.pop %v738
        %v740 = vsel %vm420, %v733, 0.0
        %v741 = vsel %vm421, %v735, 0.0
        %v742 = vsel %vm422, %v737, 0.0
        %v743 = vsel %vm423, %v739, 0.0
        %v744 = vsel %vm715, %v740, 0.0
        %745 = vadd.xlane.f32.xlu0 %v744
        %v746 = vpop.xlane.xlu0 %745
        %v747 = vsel %vm715, %v741, 0.0
        %748 = vadd.xlane.f32.xlu0 %v747
        %v749 = vpop.xlane.xlu0 %748
        %v750 = vsel %vm715, %v742, 0.0
        %751 = vadd.xlane.f32.xlu0 %v750
        %v752 = vpop.xlane.xlu0 %751
        %v753 = vsel %vm715, %v743, 0.0
        %754 = vadd.xlane.f32.xlu0 %v753
        %v755 = vpop.xlane.xlu0 %754
        %v756 = vmax.f32 %v746, 1e-09
        %v757 = vmax.f32 %v749, 1e-09
        %v758 = vmax.f32 %v752, 1e-09
        %v759 = vmax.f32 %v755, 1e-09
        %v760 = vrcp.pop %v756
        %v761 = vrcp.pop %v757
        %v762 = vrcp.pop %v758
        %v763 = vrcp.pop %v759
        %v764 = vmul.f32 %v740, %v760
        %v765 = vmul.f32 %v741, %v761
        %v766 = vmul.f32 %v742, %v762
        %v767 = vmul.f32 %v743, %v763
        %v769 = vsel %vm715, %v764, 0
        %v772 = vsel %vm715, %v765, 0
        %v775 = vsel %vm715, %v766, 0
        %v778 = vsel %vm715, %v767, 0
        %780 = vmatprep.subr.mxu0 0.0
        %781 = vmatpush1.msra.mxu0 %v532
        %782 = vmatprep.subr.mxu0 0.0
        %783 = vmatpush1.msra.mxu0 %v538
        %784 = vmatprep.subr.mxu0 0.0
        %785 = vmatpush1.msra.mxu0 %v544
        %786 = vmatprep.subr.mxu0 0.0
        %787 = vmatpush1.msra.mxu0 %v550
        %788 = vmatprep.subr.mxu0 0.0
        %789 = vmatpush1.msra.mxu0 0.0
        %790 = vmatprep.subr.mxu0 0.0
        %791 = vmatpush1.msra.mxu0 0.0
        %792 = vmatprep.subr.mxu0 0.0
        %793 = vmatpush1.msra.mxu0 0.0
        %794 = vmatprep.subr.mxu0 0.0
        %795 = vmatpush1.msra.mxu0 0.0
        %796 = vmatprep.subr.mxu0 0.0
        %797 = vmatpush1.msra.mxu0 0.0
        %798 = vmatprep.subr.mxu0 0.0
        %799 = vmatpush1.msra.mxu0 0.0
        %800 = vmatprep.subr.mxu0 0.0
        %801 = vmatpush1.msra.mxu0 0.0
        %802 = vmatprep.subr.mxu0 0.0
        %803 = vmatpush1.msra.mxu0 0.0
        %804 = vmatprep.subr.mxu0 0.0
        %805 = vmatpush1.msra.mxu0 0.0
        %806 = vmatprep.subr.mxu0 0.0
        %807 = vmatpush1.msra.mxu0 0.0
        %808 = vmatprep.subr.mxu0 0.0
        %809 = vmatpush1.msra.mxu0 0.0
        %810 = vmatprep.subr.mxu0 0.0
        %811 = vmatpush1.msra.mxu0 0.0
        %812 = vmatprep.subr.mxu0 0.0
        %813 = vmatpush1.msra.mxu0 0.0
        %814 = vmatprep.subr.mxu0 0.0
        %815 = vmatpush1.msra.mxu0 0.0
        %816 = vmatprep.subr.mxu0 0.0
        %817 = vmatpush1.msra.mxu0 0.0
        %818 = vmatprep.subr.mxu0 0.0
        %819 = vmatpush1.msra.mxu0 0.0
        %820 = vmatprep.subr.mxu0 0.0
        %821 = vmatpush1.msra.mxu0 0.0
        %822 = vmatprep.subr.mxu0 0.0
        %823 = vmatpush1.msra.mxu0 0.0
        %824 = vmatprep.subr.mxu0 0.0
        %825 = vmatpush1.msra.mxu0 0.0
        %826 = vmatprep.subr.mxu0 0.0
        %827 = vmatpush1.msra.mxu0 0.0
        %828 = vmatprep.subr.mxu0 0.0
        %829 = vmatpush1.msra.mxu0 0.0
        %830 = vmatprep.subr.mxu0 0.0
        %831 = vmatpush1.msra.mxu0 0.0
        %832 = vmatprep.subr.mxu0 0.0
        %833 = vmatpush1.msra.mxu0 0.0
        %834 = vmatprep.subr.mxu0 0.0
        %835 = vmatpush1.msra.mxu0 0.0
        %836 = vmatprep.subr.mxu0 0.0
        %837 = vmatpush1.msra.mxu0 0.0
        %838 = vmatprep.subr.mxu0 0.0
        %839 = vmatpush1.msra.mxu0 0.0
        %840 = vmatprep.subr.mxu0 0.0
        %841 = vmatpush1.msra.mxu0 0.0
        %842 = vmatprep.subr.mxu0 0.0
        %843 = vmatpush1.msra.mxu0 0.0
        %844 = vmatprep.mubr.f32.mxu0 0.0
        %845 = vmatmul.mubr.f32.gmra.mrb[0].mxu0 %v769
        %v846 = vpop.f32.mrb[0].mxu0
        %v847 = vadd.f32 0.0, %v846
        %v848 = vpop.f32.mrb[0].mxu0
        %849 = vmatprep.mubr.f32.mxu0 0.0
        %850 = vmatmul.mubr.f32.gmra.mrb[0].mxu0 %v772
        %v851 = vpop.f32.mrb[0].mxu0
        %v852 = vadd.f32 0.0, %v851
        %v853 = vpop.f32.mrb[0].mxu0
        %854 = vmatprep.mubr.f32.mxu0 0.0
        %855 = vmatmul.mubr.f32.gmra.mrb[0].mxu0 %v775
        %v856 = vpop.f32.mrb[0].mxu0
        %v857 = vadd.f32 0.0, %v856
        %v858 = vpop.f32.mrb[0].mxu0
        %859 = vmatprep.mubr.f32.mxu0 0.0
        %860 = vmatmul.mubr.f32.gmra.mrb[0].mxu0 %v778
        %v861 = vpop.f32.mrb[0].mxu0
        %v862 = vadd.f32 0.0, %v861
        %v863 = vpop.f32.mrb[0].mxu0
        %864 = vdwg.mxu0
        %vm865 = vcmask 523264
        %866 = vst.msk [vmem:[#allocation2] sm:$0xff] %vm865, %v847
        %867 = vst.msk [vmem:[#allocation2 + $0x8] sm:$0xff] %vm865, %v852
        %868 = vst.msk [vmem:[#allocation2 + $0x10] sm:$0xff] %vm865, %v857
        %869 = vst.msk [vmem:[#allocation2 + $0x18] sm:$0xff] %vm865, %v862
        %870 = vrot.lane.b32.xlu0 %v621, 127
        %v871 = vpop.permute.xlu0 %870
        %872 = vrot.lane.b32.xlu0 %v626, 127
        %v873 = vpop.permute.xlu0 %872
        %874 = vrot.lane.b32.xlu0 %v631, 127
        %v875 = vpop.permute.xlu0 %874
        %876 = vrot.lane.b32.xlu0 %v636, 127
        %v877 = vpop.permute.xlu0 %876
        %882 = vxpose.xlu0.b32.start [1/16] %v871, 128
        %883 = vxpose.xlu0.b32.cont [2/16] %v873, 128
        %884 = vxpose.xlu0.b32.cont [3/16] %v875, 128
        %885 = vxpose.xlu0.b32.cont [4/16] %v877, 128
        %886 = vxpose.xlu0.b32.cont [5/16] 0.0, 128
        %887 = vxpose.xlu0.b32.cont [6/16] 0.0, 128
        %888 = vxpose.xlu0.b32.cont [7/16] 0.0, 128
        %889 = vxpose.xlu0.b32.cont [8/16] 0.0, 128
        %890 = vxpose.xlu0.b32.cont [9/16] 0.0, 128
        %891 = vxpose.xlu0.b32.cont [10/16] 0.0, 128
        %892 = vxpose.xlu0.b32.cont [11/16] 0.0, 128
        %893 = vxpose.xlu0.b32.cont [12/16] 0.0, 128
        %894 = vxpose.xlu0.b32.cont [13/16] 0.0, 128
        %895 = vxpose.xlu0.b32.cont [14/16] 0.0, 128
        %896 = vxpose.xlu0.b32.cont [15/16] 0.0, 128
        %897 = vxpose.xlu0.b32.end [16/16] 0.0, 128
        %v898 = vpop.trf.xlu0
        %v899 = vpop.trf.xlu0
        %v900 = vpop.trf.xlu0
        %v901 = vpop.trf.xlu0
        %v902 = vpop.trf.xlu0
        %v903 = vpop.trf.xlu0
        %v904 = vpop.trf.xlu0
        %v905 = vpop.trf.xlu0
        %v906 = vpop.trf.xlu0
        %v907 = vpop.trf.xlu0
        %v908 = vpop.trf.xlu0
        %v909 = vpop.trf.xlu0
        %v910 = vpop.trf.xlu0
        %v911 = vpop.trf.xlu0
        %v912 = vpop.trf.xlu0
        %v913 = vpop.trf.xlu0
        %914 = vset.pattern.permute.xlu0 3
        %915 = vperm.xlu0 %914, %v621
        %v916 = vpop.permute.xlu0 %915
        %918 = vset.pattern.permute.xlu0 3
        %919 = vperm.xlu0 %918, %v626
        %v920 = vpop.permute.xlu0 %919
        %922 = vset.pattern.permute.xlu0 3
        %923 = vperm.xlu0 %922, %v631
        %v924 = vpop.permute.xlu0 %923
        %926 = vset.pattern.permute.xlu0 3
        %927 = vperm.xlu0 %926, %v636
        %v928 = vpop.permute.xlu0 %927
        %v930 = vlaneseq
        %v931 = vshrl.u32 %v930, 7
        %v932 = vsub.s32 0, %v931
        %v933 = vrot.slane %v898, %v932
        %v934 = vadd.f32 %v916, %v933
        %v935 = vadd.f32 %v920, %v933
        %v936 = vadd.f32 %v924, %v933
        %v937 = vadd.f32 %v928, %v933
        %vm938 = vcmp.gt.f32.partialorder %v934, 0.0
        %vm939 = vcmp.gt.f32.partialorder %v935, 0.0
        %vm940 = vcmp.gt.f32.partialorder %v936, 0.0
        %vm941 = vcmp.gt.f32.partialorder %v937, 0.0
        %v942 = vmul.f32 %v934, 0.2
        %v943 = vmul.f32 %v935, 0.2
        %v944 = vmul.f32 %v936, 0.2
        %v945 = vmul.f32 %v937, 0.2
        %v946 = vsel %vm938, %v934, %v942
        %v947 = vsel %vm939, %v935, %v943
        %v948 = vsel %vm940, %v936, %v944
        %v949 = vsel %vm941, %v937, %v945
        %v950 = vsel %vm420, %v946, -1e+30
        %v951 = vsel %vm421, %v947, -1e+30
        %v952 = vsel %vm422, %v948, -1e+30
        %v953 = vsel %vm423, %v949, -1e+30
        %v954 = vsel %vm715, %v950, -inf
        %955 = vmax.xlane.f32.xlu0 %v954
        %v956 = vpop.xlane.xlu0 %955
        %v957 = vsel %vm715, %v951, -inf
        %958 = vmax.xlane.f32.xlu0 %v957
        %v959 = vpop.xlane.xlu0 %958
        %v960 = vsel %vm715, %v952, -inf
        %961 = vmax.xlane.f32.xlu0 %v960
        %v962 = vpop.xlane.xlu0 %961
        %v963 = vsel %vm715, %v953, -inf
        %964 = vmax.xlane.f32.xlu0 %v963
        %v965 = vpop.xlane.xlu0 %964
        %v966 = vsub.f32 %v950, %v956
        %v967 = vsub.f32 %v951, %v959
        %v968 = vsub.f32 %v952, %v962
        %v969 = vsub.f32 %v953, %v965
        %v970 = vmul.f32 %v966, 1.442695
        %v971 = vpow.pop %v970
        %v972 = vmul.f32 %v967, 1.442695
        %v973 = vpow.pop %v972
        %v974 = vmul.f32 %v968, 1.442695
        %v975 = vpow.pop %v974
        %v976 = vmul.f32 %v969, 1.442695
        %v977 = vpow.pop %v976
        %v978 = vsel %vm420, %v971, 0.0
        %v979 = vsel %vm421, %v973, 0.0
        %v980 = vsel %vm422, %v975, 0.0
        %v981 = vsel %vm423, %v977, 0.0
        %v982 = vsel %vm715, %v978, 0.0
        %983 = vadd.xlane.f32.xlu0 %v982
        %v984 = vpop.xlane.xlu0 %983
        %v985 = vsel %vm715, %v979, 0.0
        %986 = vadd.xlane.f32.xlu0 %v985
        %v987 = vpop.xlane.xlu0 %986
        %v988 = vsel %vm715, %v980, 0.0
        %989 = vadd.xlane.f32.xlu0 %v988
        %v990 = vpop.xlane.xlu0 %989
        %v991 = vsel %vm715, %v981, 0.0
        %992 = vadd.xlane.f32.xlu0 %v991
        %v993 = vpop.xlane.xlu0 %992
        %v994 = vmax.f32 %v984, 1e-09
        %v995 = vmax.f32 %v987, 1e-09
        %v996 = vmax.f32 %v990, 1e-09
        %v997 = vmax.f32 %v993, 1e-09
        %v998 = vrcp.pop %v994
        %v999 = vrcp.pop %v995
        %v1000 = vrcp.pop %v996
        %v1001 = vrcp.pop %v997
        %v1002 = vmul.f32 %v978, %v998
        %v1003 = vmul.f32 %v979, %v999
        %v1004 = vmul.f32 %v980, %v1000
        %v1005 = vmul.f32 %v981, %v1001
        %1010 = vrot.lane.b32.xlu0 %v532, 64
        %v1011 = vpop.permute.xlu0 %1010
        %1012 = vrot.lane.b32.xlu0 %v538, 64
        %v1013 = vpop.permute.xlu0 %1012
        %1014 = vrot.lane.b32.xlu0 %v544, 64
        %v1015 = vpop.permute.xlu0 %1014
        %1016 = vrot.lane.b32.xlu0 %v550, 64
        %v1017 = vpop.permute.xlu0 %1016
        %v1023 = vsel %vm715, %v1002, 0
        %v1026 = vsel %vm715, %v1003, 0
        %v1029 = vsel %vm715, %v1004, 0
        %v1032 = vsel %vm715, %v1005, 0
        %1034 = vmatprep.subr.mxu0 0.0
        %1035 = vmatpush1.msra.mxu0 %v1011
        %1036 = vmatprep.subr.mxu0 0.0
        %1037 = vmatpush1.msra.mxu0 %v1013
        %1038 = vmatprep.subr.mxu0 0.0
        %1039 = vmatpush1.msra.mxu0 %v1015
        %1040 = vmatprep.subr.mxu0 0.0
        %1041 = vmatpush1.msra.mxu0 %v1017
        %1042 = vmatprep.subr.mxu0 0.0
        %1043 = vmatpush1.msra.mxu0 0.0
        %1044 = vmatprep.subr.mxu0 0.0
        %1045 = vmatpush1.msra.mxu0 0.0
        %1046 = vmatprep.subr.mxu0 0.0
        %1047 = vmatpush1.msra.mxu0 0.0
        %1048 = vmatprep.subr.mxu0 0.0
        %1049 = vmatpush1.msra.mxu0 0.0
        %1050 = vmatprep.subr.mxu0 0.0
        %1051 = vmatpush1.msra.mxu0 0.0
        %1052 = vmatprep.subr.mxu0 0.0
        %1053 = vmatpush1.msra.mxu0 0.0
        %1054 = vmatprep.subr.mxu0 0.0
        %1055 = vmatpush1.msra.mxu0 0.0
        %1056 = vmatprep.subr.mxu0 0.0
        %1057 = vmatpush1.msra.mxu0 0.0
        %1058 = vmatprep.subr.mxu0 0.0
        %1059 = vmatpush1.msra.mxu0 0.0
        %1060 = vmatprep.subr.mxu0 0.0
        %1061 = vmatpush1.msra.mxu0 0.0
        %1062 = vmatprep.subr.mxu0 0.0
        %1063 = vmatpush1.msra.mxu0 0.0
        %1064 = vmatprep.subr.mxu0 0.0
        %1065 = vmatpush1.msra.mxu0 0.0
        %1066 = vmatprep.subr.mxu0 0.0
        %1067 = vmatpush1.msra.mxu0 0.0
        %1068 = vmatprep.subr.mxu0 0.0
        %1069 = vmatpush1.msra.mxu0 0.0
        %1070 = vmatprep.subr.mxu0 0.0
        %1071 = vmatpush1.msra.mxu0 0.0
        %1072 = vmatprep.subr.mxu0 0.0
        %1073 = vmatpush1.msra.mxu0 0.0
        %1074 = vmatprep.subr.mxu0 0.0
        %1075 = vmatpush1.msra.mxu0 0.0
        %1076 = vmatprep.subr.mxu0 0.0
        %1077 = vmatpush1.msra.mxu0 0.0
        %1078 = vmatprep.subr.mxu0 0.0
        %1079 = vmatpush1.msra.mxu0 0.0
        %1080 = vmatprep.subr.mxu0 0.0
        %1081 = vmatpush1.msra.mxu0 0.0
        %1082 = vmatprep.subr.mxu0 0.0
        %1083 = vmatpush1.msra.mxu0 0.0
        %1084 = vmatprep.subr.mxu0 0.0
        %1085 = vmatpush1.msra.mxu0 0.0
        %1086 = vmatprep.subr.mxu0 0.0
        %1087 = vmatpush1.msra.mxu0 0.0
        %1088 = vmatprep.subr.mxu0 0.0
        %1089 = vmatpush1.msra.mxu0 0.0
        %1090 = vmatprep.subr.mxu0 0.0
        %1091 = vmatpush1.msra.mxu0 0.0
        %1092 = vmatprep.subr.mxu0 0.0
        %1093 = vmatpush1.msra.mxu0 0.0
        %1094 = vmatprep.subr.mxu0 0.0
        %1095 = vmatpush1.msra.mxu0 0.0
        %1096 = vmatprep.subr.mxu0 0.0
        %1097 = vmatpush1.msra.mxu0 0.0
        %1098 = vmatprep.mubr.f32.mxu0 0.0
        %1099 = vmatmul.mubr.f32.gmra.mrb[0].mxu0 %v1023
        %v1100 = vpop.f32.mrb[0].mxu0
        %v1101 = vadd.f32 0.0, %v1100
        %v1102 = vpop.f32.mrb[0].mxu0
        %1103 = vmatprep.mubr.f32.mxu0 0.0
        %1104 = vmatmul.mubr.f32.gmra.mrb[0].mxu0 %v1026
        %v1105 = vpop.f32.mrb[0].mxu0
        %v1106 = vadd.f32 0.0, %v1105
        %v1107 = vpop.f32.mrb[0].mxu0
        %1108 = vmatprep.mubr.f32.mxu0 0.0
        %1109 = vmatmul.mubr.f32.gmra.mrb[0].mxu0 %v1029
        %v1110 = vpop.f32.mrb[0].mxu0
        %v1111 = vadd.f32 0.0, %v1110
        %v1112 = vpop.f32.mrb[0].mxu0
        %1113 = vmatprep.mubr.f32.mxu0 0.0
        %1114 = vmatmul.mubr.f32.gmra.mrb[0].mxu0 %v1032
        %v1115 = vpop.f32.mrb[0].mxu0
        %v1116 = vadd.f32 0.0, %v1115
        %v1117 = vpop.f32.mrb[0].mxu0
        %1118 = vdwg.mxu0
        %1123 = vrot.lane.b32.xlu0 %v1101, 64
        %v1124 = vpop.permute.xlu0 %1123
        %1125 = vrot.lane.b32.xlu0 %v1106, 64
        %v1126 = vpop.permute.xlu0 %1125
        %1127 = vrot.lane.b32.xlu0 %v1111, 64
        %v1128 = vpop.permute.xlu0 %1127
        %1129 = vrot.lane.b32.xlu0 %v1116, 64
        %v1130 = vpop.permute.xlu0 %1129
        %vm1135 = vcmask 1048064
        %1136 = vst.msk [vmem:[#allocation2] sm:$0xff] %vm1135, %v1124
        %1137 = vst.msk [vmem:[#allocation2 + $0x8] sm:$0xff] %vm1135, %v1126
        %1138 = vst.msk [vmem:[#allocation2 + $0x10] sm:$0xff] %vm1135, %v1128
        %1139 = vst.msk [vmem:[#allocation2 + $0x18] sm:$0xff] %vm1135, %v1130
        %v1140 = vld [vmem:[#allocation2] sm:$0xff]
        %v1141 = vld [vmem:[#allocation2 + $0x8] sm:$0xff]
        %v1142 = vld [vmem:[#allocation2 + $0x10] sm:$0xff]
        %v1143 = vld [vmem:[#allocation2 + $0x18] sm:$0xff]
        %v1144 = vadd.f32 %v1140, %v534
        %v1145 = vadd.f32 %v1141, %v540
        %v1146 = vadd.f32 %v1142, %v546
        %v1147 = vadd.f32 %v1143, %v552
        %v1149 = vlaneseq
        %v1150 = vshrl.u32 %v1149, 7
        %v1151 = vsub.s32 0, %v1150
        %v1152 = vrot.slane %v444, %v1151
        %v1154 = vadd.f32 %v1144, %v1152
        %v1155 = vadd.f32 %v1145, %v1152
        %v1156 = vadd.f32 %v1146, %v1152
        %v1157 = vadd.f32 %v1147, %v1152
        %v1158 = vmax.f32 %v1154, 0.0
        %v1159 = vmax.f32 %v1155, 0.0
        %v1160 = vmax.f32 %v1156, 0.0
        %v1161 = vmax.f32 %v1157, 0.0
        %v1162 = vld [vmem:[%s403] sm:$0xff]
        %v1163 = vld [vmem:[%s403 + $0x8] sm:$0xff]
        %v1164 = vld [vmem:[%s403 + $0x10] sm:$0xff]
        %v1165 = vld [vmem:[%s403 + $0x18] sm:$0xff]
        %v1166 = vld [vmem:[%s403 + $0x20] sm:$0xff]
        %v1167 = vld [vmem:[%s403 + $0x28] sm:$0xff]
        %v1168 = vld [vmem:[%s403 + $0x30] sm:$0xff]
        %v1169 = vld [vmem:[%s403 + $0x38] sm:$0xff]
        %v1170 = vld [vmem:[%s403 + $0x40] sm:$0xff]
        %v1171 = vld [vmem:[%s403 + $0x48] sm:$0xff]
        %v1172 = vld [vmem:[%s403 + $0x50] sm:$0xff]
        %v1173 = vld [vmem:[%s403 + $0x58] sm:$0xff]
        %v1174 = vld [vmem:[%s403 + $0x60] sm:$0xff]
        %v1175 = vld [vmem:[%s403 + $0x68] sm:$0xff]
        %v1176 = vld [vmem:[%s403 + $0x70] sm:$0xff]
        %v1177 = vld [vmem:[%s403 + $0x78] sm:$0xff]
        %v1178 = vld [vmem:[%s408] sm:$0xff]
        %v1179 = vld [vmem:[%s408 + $0x8] sm:$0xff]
        %v1180 = vld [vmem:[%s408 + $0x10] sm:$0xff]
        %v1181 = vld [vmem:[%s408 + $0x18] sm:$0xff]
        %v1182 = vld [vmem:[%s411] sm:$0x1]
        %1183 = vmatprep.subr.mxu0 0.0
        %1184 = vmatpush1.msra.mxu0 %v1162
        %1185 = vmatprep.subr.mxu0 0.0
        %1186 = vmatpush1.msra.mxu0 %v1163
        %1187 = vmatprep.subr.mxu0 0.0
        %1188 = vmatpush1.msra.mxu0 %v1164
        %1189 = vmatprep.subr.mxu0 0.0
        %1190 = vmatpush1.msra.mxu0 %v1165
        %1191 = vmatprep.subr.mxu0 0.0
        %1192 = vmatpush1.msra.mxu0 %v1166
        %1193 = vmatprep.subr.mxu0 0.0
        %1194 = vmatpush1.msra.mxu0 %v1167
        %1195 = vmatprep.subr.mxu0 0.0
        %1196 = vmatpush1.msra.mxu0 %v1168
        %1197 = vmatprep.subr.mxu0 0.0
        %1198 = vmatpush1.msra.mxu0 %v1169
        %1199 = vmatprep.subr.mxu0 0.0
        %1200 = vmatpush1.msra.mxu0 %v1170
        %1201 = vmatprep.subr.mxu0 0.0
        %1202 = vmatpush1.msra.mxu0 %v1171
        %1203 = vmatprep.subr.mxu0 0.0
        %1204 = vmatpush1.msra.mxu0 %v1172
        %1205 = vmatprep.subr.mxu0 0.0
        %1206 = vmatpush1.msra.mxu0 %v1173
        %1207 = vmatprep.subr.mxu0 0.0
        %1208 = vmatpush1.msra.mxu0 %v1174
        %1209 = vmatprep.subr.mxu0 0.0
        %1210 = vmatpush1.msra.mxu0 %v1175
        %1211 = vmatprep.subr.mxu0 0.0
        %1212 = vmatpush1.msra.mxu0 %v1176
        %1213 = vmatprep.subr.mxu0 0.0
        %1214 = vmatpush1.msra.mxu0 %v1177
        %1215 = vmatprep.subr.mxu0 0.0
        %1216 = vmatpush1.msra.mxu0 0.0
        %1217 = vmatprep.subr.mxu0 0.0
        %1218 = vmatpush1.msra.mxu0 0.0
        %1219 = vmatprep.subr.mxu0 0.0
        %1220 = vmatpush1.msra.mxu0 0.0
        %1221 = vmatprep.subr.mxu0 0.0
        %1222 = vmatpush1.msra.mxu0 0.0
        %1223 = vmatprep.subr.mxu0 0.0
        %1224 = vmatpush1.msra.mxu0 0.0
        %1225 = vmatprep.subr.mxu0 0.0
        %1226 = vmatpush1.msra.mxu0 0.0
        %1227 = vmatprep.subr.mxu0 0.0
        %1228 = vmatpush1.msra.mxu0 0.0
        %1229 = vmatprep.subr.mxu0 0.0
        %1230 = vmatpush1.msra.mxu0 0.0
        %1231 = vmatprep.subr.mxu0 0.0
        %1232 = vmatpush1.msra.mxu0 0.0
        %1233 = vmatprep.subr.mxu0 0.0
        %1234 = vmatpush1.msra.mxu0 0.0
        %1235 = vmatprep.subr.mxu0 0.0
        %1236 = vmatpush1.msra.mxu0 0.0
        %1237 = vmatprep.subr.mxu0 0.0
        %1238 = vmatpush1.msra.mxu0 0.0
        %1239 = vmatprep.subr.mxu0 0.0
        %1240 = vmatpush1.msra.mxu0 0.0
        %1241 = vmatprep.subr.mxu0 0.0
        %1242 = vmatpush1.msra.mxu0 0.0
        %1243 = vmatprep.subr.mxu0 0.0
        %1244 = vmatpush1.msra.mxu0 0.0
        %1245 = vmatprep.subr.mxu0 0.0
        %1246 = vmatpush1.msra.mxu0 0.0
        %1247 = vmatprep.mubr.f32.mxu0 0.0
        %1248 = vmatmul.mubr.f32.gmra.mrb[0].mxu0 %v1158
        %v1249 = vpop.f32.mrb[0].mxu0
        %v1250 = vadd.f32 0.0, %v1249
        %v1251 = vpop.f32.mrb[0].mxu0
        %1252 = vmatprep.mubr.f32.mxu0 0.0
        %1253 = vmatmul.mubr.f32.gmra.mrb[0].mxu0 %v1159
        %v1254 = vpop.f32.mrb[0].mxu0
        %v1255 = vadd.f32 0.0, %v1254
        %v1256 = vpop.f32.mrb[0].mxu0
        %1257 = vmatprep.mubr.f32.mxu0 0.0
        %1258 = vmatmul.mubr.f32.gmra.mrb[0].mxu0 %v1160
        %v1259 = vpop.f32.mrb[0].mxu0
        %v1260 = vadd.f32 0.0, %v1259
        %v1261 = vpop.f32.mrb[0].mxu0
        %1262 = vmatprep.mubr.f32.mxu0 0.0
        %1263 = vmatmul.mubr.f32.gmra.mrb[0].mxu0 %v1161
        %v1264 = vpop.f32.mrb[0].mxu0
        %v1265 = vadd.f32 0.0, %v1264
        %v1266 = vpop.f32.mrb[0].mxu0
        %1267 = vdwg.mxu0
        %v1269 = vsel %vm715, %v1250, 0
        %v1272 = vsel %vm715, %v1255, 0
        %v1275 = vsel %vm715, %v1260, 0
        %v1278 = vsel %vm715, %v1265, 0
        %1280 = vmatprep.subr.mxu0 0.0
        %1281 = vmatpush1.msra.mxu0 %v1178
        %1282 = vmatprep.subr.mxu0 0.0
        %1283 = vmatpush1.msra.mxu0 %v1179
        %1284 = vmatprep.subr.mxu0 0.0
        %1285 = vmatpush1.msra.mxu0 %v1180
        %1286 = vmatprep.subr.mxu0 0.0
        %1287 = vmatpush1.msra.mxu0 %v1181
        %1288 = vmatprep.subr.mxu0 0.0
        %1289 = vmatpush1.msra.mxu0 0.0
        %1290 = vmatprep.subr.mxu0 0.0
        %1291 = vmatpush1.msra.mxu0 0.0
        %1292 = vmatprep.subr.mxu0 0.0
        %1293 = vmatpush1.msra.mxu0 0.0
        %1294 = vmatprep.subr.mxu0 0.0
        %1295 = vmatpush1.msra.mxu0 0.0
        %1296 = vmatprep.subr.mxu0 0.0
        %1297 = vmatpush1.msra.mxu0 0.0
        %1298 = vmatprep.subr.mxu0 0.0
        %1299 = vmatpush1.msra.mxu0 0.0
        %1300 = vmatprep.subr.mxu0 0.0
        %1301 = vmatpush1.msra.mxu0 0.0
        %1302 = vmatprep.subr.mxu0 0.0
        %1303 = vmatpush1.msra.mxu0 0.0
        %1304 = vmatprep.subr.mxu0 0.0
        %1305 = vmatpush1.msra.mxu0 0.0
        %1306 = vmatprep.subr.mxu0 0.0
        %1307 = vmatpush1.msra.mxu0 0.0
        %1308 = vmatprep.subr.mxu0 0.0
        %1309 = vmatpush1.msra.mxu0 0.0
        %1310 = vmatprep.subr.mxu0 0.0
        %1311 = vmatpush1.msra.mxu0 0.0
        %1312 = vmatprep.subr.mxu0 0.0
        %1313 = vmatpush1.msra.mxu0 0.0
        %1314 = vmatprep.subr.mxu0 0.0
        %1315 = vmatpush1.msra.mxu0 0.0
        %1316 = vmatprep.subr.mxu0 0.0
        %1317 = vmatpush1.msra.mxu0 0.0
        %1318 = vmatprep.subr.mxu0 0.0
        %1319 = vmatpush1.msra.mxu0 0.0
        %1320 = vmatprep.subr.mxu0 0.0
        %1321 = vmatpush1.msra.mxu0 0.0
        %1322 = vmatprep.subr.mxu0 0.0
        %1323 = vmatpush1.msra.mxu0 0.0
        %1324 = vmatprep.subr.mxu0 0.0
        %1325 = vmatpush1.msra.mxu0 0.0
        %1326 = vmatprep.subr.mxu0 0.0
        %1327 = vmatpush1.msra.mxu0 0.0
        %1328 = vmatprep.subr.mxu0 0.0
        %1329 = vmatpush1.msra.mxu0 0.0
        %1330 = vmatprep.subr.mxu0 0.0
        %1331 = vmatpush1.msra.mxu0 0.0
        %1332 = vmatprep.subr.mxu0 0.0
        %1333 = vmatpush1.msra.mxu0 0.0
        %1334 = vmatprep.subr.mxu0 0.0
        %1335 = vmatpush1.msra.mxu0 0.0
        %1336 = vmatprep.subr.mxu0 0.0
        %1337 = vmatpush1.msra.mxu0 0.0
        %1338 = vmatprep.subr.mxu0 0.0
        %1339 = vmatpush1.msra.mxu0 0.0
        %1340 = vmatprep.subr.mxu0 0.0
        %1341 = vmatpush1.msra.mxu0 0.0
        %1342 = vmatprep.subr.mxu0 0.0
        %1343 = vmatpush1.msra.mxu0 0.0
        %1344 = vmatprep.mubr.f32.mxu0 0.0
        %1345 = vmatmul.mubr.f32.gmra.mrb[0].mxu0 %v1269
        %v1346 = vpop.f32.mrb[0].mxu0
        %v1347 = vadd.f32 0.0, %v1346
        %v1348 = vpop.f32.mrb[0].mxu0
        %1349 = vmatprep.mubr.f32.mxu0 0.0
        %1350 = vmatmul.mubr.f32.gmra.mrb[0].mxu0 %v1272
        %v1351 = vpop.f32.mrb[0].mxu0
        %v1352 = vadd.f32 0.0, %v1351
        %v1353 = vpop.f32.mrb[0].mxu0
        %1354 = vmatprep.mubr.f32.mxu0 0.0
        %1355 = vmatmul.mubr.f32.gmra.mrb[0].mxu0 %v1275
        %v1356 = vpop.f32.mrb[0].mxu0
        %v1357 = vadd.f32 0.0, %v1356
        %v1358 = vpop.f32.mrb[0].mxu0
        %1359 = vmatprep.mubr.f32.mxu0 0.0
        %1360 = vmatmul.mubr.f32.gmra.mrb[0].mxu0 %v1278
        %v1361 = vpop.f32.mrb[0].mxu0
        %v1362 = vadd.f32 0.0, %v1361
        %v1363 = vpop.f32.mrb[0].mxu0
        %1364 = vdwg.mxu0
        %1365 = vxpose.xlu0.b32.start [1/16] %v1347, 128
        %1366 = vxpose.xlu0.b32.cont [2/16] %v1352, 128
        %1367 = vxpose.xlu0.b32.cont [3/16] %v1357, 128
        %1368 = vxpose.xlu0.b32.cont [4/16] %v1362, 128
        %1369 = vxpose.xlu0.b32.cont [5/16] 0.0, 128
        %1370 = vxpose.xlu0.b32.cont [6/16] 0.0, 128
        %1371 = vxpose.xlu0.b32.cont [7/16] 0.0, 128
        %1372 = vxpose.xlu0.b32.cont [8/16] 0.0, 128
        %1373 = vxpose.xlu0.b32.cont [9/16] 0.0, 128
        %1374 = vxpose.xlu0.b32.cont [10/16] 0.0, 128
        %1375 = vxpose.xlu0.b32.cont [11/16] 0.0, 128
        %1376 = vxpose.xlu0.b32.cont [12/16] 0.0, 128
        %1377 = vxpose.xlu0.b32.cont [13/16] 0.0, 128
        %1378 = vxpose.xlu0.b32.cont [14/16] 0.0, 128
        %1379 = vxpose.xlu0.b32.cont [15/16] 0.0, 128
        %1380 = vxpose.xlu0.b32.end [16/16] 0.0, 128
        %v1381 = vpop.trf.xlu0
        %v1382 = vpop.trf.xlu0
        %v1383 = vpop.trf.xlu0
        %v1384 = vpop.trf.xlu0
        %v1385 = vpop.trf.xlu0
        %v1386 = vpop.trf.xlu0
        %v1387 = vpop.trf.xlu0
        %v1388 = vpop.trf.xlu0
        %v1389 = vpop.trf.xlu0
        %v1390 = vpop.trf.xlu0
        %v1391 = vpop.trf.xlu0
        %v1392 = vpop.trf.xlu0
        %v1393 = vpop.trf.xlu0
        %v1394 = vpop.trf.xlu0
        %v1395 = vpop.trf.xlu0
        %v1396 = vpop.trf.xlu0
        %1398 = vset.pattern.permute.xlu0 2
        %1399 = vperm.xlu0 %1398, %v1347
        %v1400 = vpop.permute.xlu0 %1399
        %1403 = vset.pattern.permute.xlu0 2
        %1404 = vperm.xlu0 %1403, %v1352
        %v1405 = vpop.permute.xlu0 %1404
        %1408 = vset.pattern.permute.xlu0 2
        %1409 = vperm.xlu0 %1408, %v1357
        %v1410 = vpop.permute.xlu0 %1409
        %1413 = vset.pattern.permute.xlu0 2
        %1414 = vperm.xlu0 %1413, %v1362
        %v1415 = vpop.permute.xlu0 %1414
        %v1417 = vlaneseq
        %v1418 = vshrl.u32 %v1417, 7
        %v1419 = vsub.s32 0, %v1418
        %v1420 = vrot.slane %v1381, %v1419
        %v1421 = vadd.f32 %v1400, %v1420
        %v1422 = vadd.f32 %v1405, %v1420
        %v1423 = vadd.f32 %v1410, %v1420
        %v1424 = vadd.f32 %v1415, %v1420
        %vm1425 = vcmp.gt.f32.partialorder %v1421, 0.0
        %vm1426 = vcmp.gt.f32.partialorder %v1422, 0.0
        %vm1427 = vcmp.gt.f32.partialorder %v1423, 0.0
        %vm1428 = vcmp.gt.f32.partialorder %v1424, 0.0
        %v1429 = vmul.f32 %v1421, 0.2
        %v1430 = vmul.f32 %v1422, 0.2
        %v1431 = vmul.f32 %v1423, 0.2
        %v1432 = vmul.f32 %v1424, 0.2
        %v1433 = vsel %vm1425, %v1421, %v1429
        %v1434 = vsel %vm1426, %v1422, %v1430
        %v1435 = vsel %vm1427, %v1423, %v1431
        %v1436 = vsel %vm1428, %v1424, %v1432
        %v1437 = vsel %vm420, %v1433, -1e+30
        %v1438 = vsel %vm421, %v1434, -1e+30
        %v1439 = vsel %vm422, %v1435, -1e+30
        %v1440 = vsel %vm423, %v1436, -1e+30
        %v1441 = vsel %vm715, %v1437, -inf
        %1442 = vmax.xlane.f32.xlu0 %v1441
        %v1443 = vpop.xlane.xlu0 %1442
        %v1444 = vsel %vm715, %v1438, -inf
        %1445 = vmax.xlane.f32.xlu0 %v1444
        %v1446 = vpop.xlane.xlu0 %1445
        %v1447 = vsel %vm715, %v1439, -inf
        %1448 = vmax.xlane.f32.xlu0 %v1447
        %v1449 = vpop.xlane.xlu0 %1448
        %v1450 = vsel %vm715, %v1440, -inf
        %1451 = vmax.xlane.f32.xlu0 %v1450
        %v1452 = vpop.xlane.xlu0 %1451
        %v1453 = vsub.f32 %v1437, %v1443
        %v1454 = vsub.f32 %v1438, %v1446
        %v1455 = vsub.f32 %v1439, %v1449
        %v1456 = vsub.f32 %v1440, %v1452
        %v1457 = vmul.f32 %v1453, 1.442695
        %v1458 = vpow.pop %v1457
        %v1459 = vmul.f32 %v1454, 1.442695
        %v1460 = vpow.pop %v1459
        %v1461 = vmul.f32 %v1455, 1.442695
        %v1462 = vpow.pop %v1461
        %v1463 = vmul.f32 %v1456, 1.442695
        %v1464 = vpow.pop %v1463
        %v1465 = vsel %vm420, %v1458, 0.0
        %v1466 = vsel %vm421, %v1460, 0.0
        %v1467 = vsel %vm422, %v1462, 0.0
        %v1468 = vsel %vm423, %v1464, 0.0
        %v1469 = vsel %vm715, %v1465, 0.0
        %1470 = vadd.xlane.f32.xlu0 %v1469
        %v1471 = vpop.xlane.xlu0 %1470
        %v1472 = vsel %vm715, %v1466, 0.0
        %1473 = vadd.xlane.f32.xlu0 %v1472
        %v1474 = vpop.xlane.xlu0 %1473
        %v1475 = vsel %vm715, %v1467, 0.0
        %1476 = vadd.xlane.f32.xlu0 %v1475
        %v1477 = vpop.xlane.xlu0 %1476
        %v1478 = vsel %vm715, %v1468, 0.0
        %1479 = vadd.xlane.f32.xlu0 %v1478
        %v1480 = vpop.xlane.xlu0 %1479
        %v1481 = vmax.f32 %v1471, 1e-09
        %v1482 = vmax.f32 %v1474, 1e-09
        %v1483 = vmax.f32 %v1477, 1e-09
        %v1484 = vmax.f32 %v1480, 1e-09
        %v1485 = vrcp.pop %v1481
        %v1486 = vrcp.pop %v1482
        %v1487 = vrcp.pop %v1483
        %v1488 = vrcp.pop %v1484
        %v1489 = vmul.f32 %v1465, %v1485
        %v1490 = vmul.f32 %v1466, %v1486
        %v1491 = vmul.f32 %v1467, %v1487
        %v1492 = vmul.f32 %v1468, %v1488
        %v1494 = vsel %vm715, %v1489, 0
        %v1497 = vsel %vm715, %v1490, 0
        %v1500 = vsel %vm715, %v1491, 0
        %v1503 = vsel %vm715, %v1492, 0
        %1505 = vmatprep.subr.mxu0 0.0
        %1506 = vmatpush1.msra.mxu0 %v1250
        %1507 = vmatprep.subr.mxu0 0.0
        %1508 = vmatpush1.msra.mxu0 %v1255
        %1509 = vmatprep.subr.mxu0 0.0
        %1510 = vmatpush1.msra.mxu0 %v1260
        %1511 = vmatprep.subr.mxu0 0.0
        %1512 = vmatpush1.msra.mxu0 %v1265
        %1513 = vmatprep.subr.mxu0 0.0
        %1514 = vmatpush1.msra.mxu0 0.0
        %1515 = vmatprep.subr.mxu0 0.0
        %1516 = vmatpush1.msra.mxu0 0.0
        %1517 = vmatprep.subr.mxu0 0.0
        %1518 = vmatpush1.msra.mxu0 0.0
        %1519 = vmatprep.subr.mxu0 0.0
        %1520 = vmatpush1.msra.mxu0 0.0
        %1521 = vmatprep.subr.mxu0 0.0
        %1522 = vmatpush1.msra.mxu0 0.0
        %1523 = vmatprep.subr.mxu0 0.0
        %1524 = vmatpush1.msra.mxu0 0.0
        %1525 = vmatprep.subr.mxu0 0.0
        %1526 = vmatpush1.msra.mxu0 0.0
        %1527 = vmatprep.subr.mxu0 0.0
        %1528 = vmatpush1.msra.mxu0 0.0
        %1529 = vmatprep.subr.mxu0 0.0
        %1530 = vmatpush1.msra.mxu0 0.0
        %1531 = vmatprep.subr.mxu0 0.0
        %1532 = vmatpush1.msra.mxu0 0.0
        %1533 = vmatprep.subr.mxu0 0.0
        %1534 = vmatpush1.msra.mxu0 0.0
        %1535 = vmatprep.subr.mxu0 0.0
        %1536 = vmatpush1.msra.mxu0 0.0
        %1537 = vmatprep.subr.mxu0 0.0
        %1538 = vmatpush1.msra.mxu0 0.0
        %1539 = vmatprep.subr.mxu0 0.0
        %1540 = vmatpush1.msra.mxu0 0.0
        %1541 = vmatprep.subr.mxu0 0.0
        %1542 = vmatpush1.msra.mxu0 0.0
        %1543 = vmatprep.subr.mxu0 0.0
        %1544 = vmatpush1.msra.mxu0 0.0
        %1545 = vmatprep.subr.mxu0 0.0
        %1546 = vmatpush1.msra.mxu0 0.0
        %1547 = vmatprep.subr.mxu0 0.0
        %1548 = vmatpush1.msra.mxu0 0.0
        %1549 = vmatprep.subr.mxu0 0.0
        %1550 = vmatpush1.msra.mxu0 0.0
        %1551 = vmatprep.subr.mxu0 0.0
        %1552 = vmatpush1.msra.mxu0 0.0
        %1553 = vmatprep.subr.mxu0 0.0
        %1554 = vmatpush1.msra.mxu0 0.0
        %1555 = vmatprep.subr.mxu0 0.0
        %1556 = vmatpush1.msra.mxu0 0.0
        %1557 = vmatprep.subr.mxu0 0.0
        %1558 = vmatpush1.msra.mxu0 0.0
        %1559 = vmatprep.subr.mxu0 0.0
        %1560 = vmatpush1.msra.mxu0 0.0
        %1561 = vmatprep.subr.mxu0 0.0
        %1562 = vmatpush1.msra.mxu0 0.0
        %1563 = vmatprep.subr.mxu0 0.0
        %1564 = vmatpush1.msra.mxu0 0.0
        %1565 = vmatprep.subr.mxu0 0.0
        %1566 = vmatpush1.msra.mxu0 0.0
        %1567 = vmatprep.subr.mxu0 0.0
        %1568 = vmatpush1.msra.mxu0 0.0
        %1569 = vmatprep.mubr.f32.mxu0 0.0
        %1570 = vmatmul.mubr.f32.gmra.mrb[0].mxu0 %v1494
        %v1571 = vpop.f32.mrb[0].mxu0
        %v1572 = vadd.f32 0.0, %v1571
        %v1573 = vpop.f32.mrb[0].mxu0
        %1574 = vmatprep.mubr.f32.mxu0 0.0
        %1575 = vmatmul.mubr.f32.gmra.mrb[0].mxu0 %v1497
        %v1576 = vpop.f32.mrb[0].mxu0
        %v1577 = vadd.f32 0.0, %v1576
        %v1578 = vpop.f32.mrb[0].mxu0
        %1579 = vmatprep.mubr.f32.mxu0 0.0
        %1580 = vmatmul.mubr.f32.gmra.mrb[0].mxu0 %v1500
        %v1581 = vpop.f32.mrb[0].mxu0
        %v1582 = vadd.f32 0.0, %v1581
        %v1583 = vpop.f32.mrb[0].mxu0
        %1584 = vmatprep.mubr.f32.mxu0 0.0
        %1585 = vmatmul.mubr.f32.gmra.mrb[0].mxu0 %v1503
        %v1586 = vpop.f32.mrb[0].mxu0
        %v1587 = vadd.f32 0.0, %v1586
        %v1588 = vpop.f32.mrb[0].mxu0
        %1589 = vdwg.mxu0
        %vm1590 = vcmask 130048
        %1591 = vst.msk [vmem:[#allocation3] sm:$0xff] %vm1590, %v1572
        %1592 = vst.msk [vmem:[#allocation3 + $0x8] sm:$0xff] %vm1590, %v1577
        %1593 = vst.msk [vmem:[#allocation3 + $0x10] sm:$0xff] %vm1590, %v1582
        %1594 = vst.msk [vmem:[#allocation3 + $0x18] sm:$0xff] %vm1590, %v1587
        %1595 = vrot.lane.b32.xlu0 %v1347, 127
        %v1596 = vpop.permute.xlu0 %1595
        %1597 = vrot.lane.b32.xlu0 %v1352, 127
        %v1598 = vpop.permute.xlu0 %1597
        %1599 = vrot.lane.b32.xlu0 %v1357, 127
        %v1600 = vpop.permute.xlu0 %1599
        %1601 = vrot.lane.b32.xlu0 %v1362, 127
        %v1602 = vpop.permute.xlu0 %1601
        %1607 = vxpose.xlu0.b32.start [1/16] %v1596, 128
        %1608 = vxpose.xlu0.b32.cont [2/16] %v1598, 128
        %1609 = vxpose.xlu0.b32.cont [3/16] %v1600, 128
        %1610 = vxpose.xlu0.b32.cont [4/16] %v1602, 128
        %1611 = vxpose.xlu0.b32.cont [5/16] 0.0, 128
        %1612 = vxpose.xlu0.b32.cont [6/16] 0.0, 128
        %1613 = vxpose.xlu0.b32.cont [7/16] 0.0, 128
        %1614 = vxpose.xlu0.b32.cont [8/16] 0.0, 128
        %1615 = vxpose.xlu0.b32.cont [9/16] 0.0, 128
        %1616 = vxpose.xlu0.b32.cont [10/16] 0.0, 128
        %1617 = vxpose.xlu0.b32.cont [11/16] 0.0, 128
        %1618 = vxpose.xlu0.b32.cont [12/16] 0.0, 128
        %1619 = vxpose.xlu0.b32.cont [13/16] 0.0, 128
        %1620 = vxpose.xlu0.b32.cont [14/16] 0.0, 128
        %1621 = vxpose.xlu0.b32.cont [15/16] 0.0, 128
        %1622 = vxpose.xlu0.b32.end [16/16] 0.0, 128
        %v1623 = vpop.trf.xlu0
        %v1624 = vpop.trf.xlu0
        %v1625 = vpop.trf.xlu0
        %v1626 = vpop.trf.xlu0
        %v1627 = vpop.trf.xlu0
        %v1628 = vpop.trf.xlu0
        %v1629 = vpop.trf.xlu0
        %v1630 = vpop.trf.xlu0
        %v1631 = vpop.trf.xlu0
        %v1632 = vpop.trf.xlu0
        %v1633 = vpop.trf.xlu0
        %v1634 = vpop.trf.xlu0
        %v1635 = vpop.trf.xlu0
        %v1636 = vpop.trf.xlu0
        %v1637 = vpop.trf.xlu0
        %v1638 = vpop.trf.xlu0
        %1639 = vset.pattern.permute.xlu0 3
        %1640 = vperm.xlu0 %1639, %v1347
        %v1641 = vpop.permute.xlu0 %1640
        %1643 = vset.pattern.permute.xlu0 3
        %1644 = vperm.xlu0 %1643, %v1352
        %v1645 = vpop.permute.xlu0 %1644
        %1647 = vset.pattern.permute.xlu0 3
        %1648 = vperm.xlu0 %1647, %v1357
        %v1649 = vpop.permute.xlu0 %1648
        %1651 = vset.pattern.permute.xlu0 3
        %1652 = vperm.xlu0 %1651, %v1362
        %v1653 = vpop.permute.xlu0 %1652
        %v1655 = vlaneseq
        %v1656 = vshrl.u32 %v1655, 7
        %v1657 = vsub.s32 0, %v1656
        %v1658 = vrot.slane %v1623, %v1657
        %v1659 = vadd.f32 %v1641, %v1658
        %v1660 = vadd.f32 %v1645, %v1658
        %v1661 = vadd.f32 %v1649, %v1658
        %v1662 = vadd.f32 %v1653, %v1658
        %vm1663 = vcmp.gt.f32.partialorder %v1659, 0.0
        %vm1664 = vcmp.gt.f32.partialorder %v1660, 0.0
        %vm1665 = vcmp.gt.f32.partialorder %v1661, 0.0
        %vm1666 = vcmp.gt.f32.partialorder %v1662, 0.0
        %v1667 = vmul.f32 %v1659, 0.2
        %v1668 = vmul.f32 %v1660, 0.2
        %v1669 = vmul.f32 %v1661, 0.2
        %v1670 = vmul.f32 %v1662, 0.2
        %v1671 = vsel %vm1663, %v1659, %v1667
        %v1672 = vsel %vm1664, %v1660, %v1668
        %v1673 = vsel %vm1665, %v1661, %v1669
        %v1674 = vsel %vm1666, %v1662, %v1670
        %v1675 = vsel %vm420, %v1671, -1e+30
        %v1676 = vsel %vm421, %v1672, -1e+30
        %v1677 = vsel %vm422, %v1673, -1e+30
        %v1678 = vsel %vm423, %v1674, -1e+30
        %v1679 = vsel %vm715, %v1675, -inf
        %1680 = vmax.xlane.f32.xlu0 %v1679
        %v1681 = vpop.xlane.xlu0 %1680
        %v1682 = vsel %vm715, %v1676, -inf
        %1683 = vmax.xlane.f32.xlu0 %v1682
        %v1684 = vpop.xlane.xlu0 %1683
        %v1685 = vsel %vm715, %v1677, -inf
        %1686 = vmax.xlane.f32.xlu0 %v1685
        %v1687 = vpop.xlane.xlu0 %1686
        %v1688 = vsel %vm715, %v1678, -inf
        %1689 = vmax.xlane.f32.xlu0 %v1688
        %v1690 = vpop.xlane.xlu0 %1689
        %v1691 = vsub.f32 %v1675, %v1681
        %v1692 = vsub.f32 %v1676, %v1684
        %v1693 = vsub.f32 %v1677, %v1687
        %v1694 = vsub.f32 %v1678, %v1690
        %v1695 = vmul.f32 %v1691, 1.442695
        %v1696 = vpow.pop %v1695
        %v1697 = vmul.f32 %v1692, 1.442695
        %v1698 = vpow.pop %v1697
        %v1699 = vmul.f32 %v1693, 1.442695
        %v1700 = vpow.pop %v1699
        %v1701 = vmul.f32 %v1694, 1.442695
        %v1702 = vpow.pop %v1701
        %v1703 = vsel %vm420, %v1696, 0.0
        %v1704 = vsel %vm421, %v1698, 0.0
        %v1705 = vsel %vm422, %v1700, 0.0
        %v1706 = vsel %vm423, %v1702, 0.0
        %v1707 = vsel %vm715, %v1703, 0.0
        %1708 = vadd.xlane.f32.xlu0 %v1707
        %v1709 = vpop.xlane.xlu0 %1708
        %v1710 = vsel %vm715, %v1704, 0.0
        %1711 = vadd.xlane.f32.xlu0 %v1710
        %v1712 = vpop.xlane.xlu0 %1711
        %v1713 = vsel %vm715, %v1705, 0.0
        %1714 = vadd.xlane.f32.xlu0 %v1713
        %v1715 = vpop.xlane.xlu0 %1714
        %v1716 = vsel %vm715, %v1706, 0.0
        %1717 = vadd.xlane.f32.xlu0 %v1716
        %v1718 = vpop.xlane.xlu0 %1717
        %v1719 = vmax.f32 %v1709, 1e-09
        %v1720 = vmax.f32 %v1712, 1e-09
        %v1721 = vmax.f32 %v1715, 1e-09
        %v1722 = vmax.f32 %v1718, 1e-09
        %v1723 = vrcp.pop %v1719
        %v1724 = vrcp.pop %v1720
        %v1725 = vrcp.pop %v1721
        %v1726 = vrcp.pop %v1722
        %v1727 = vmul.f32 %v1703, %v1723
        %v1728 = vmul.f32 %v1704, %v1724
        %v1729 = vmul.f32 %v1705, %v1725
        %v1730 = vmul.f32 %v1706, %v1726
        %1731 = vrot.lane.b32.xlu0 %v1250, 112
        %v1732 = vpop.permute.xlu0 %1731
        %1733 = vrot.lane.b32.xlu0 %v1255, 112
        %v1734 = vpop.permute.xlu0 %1733
        %1735 = vrot.lane.b32.xlu0 %v1260, 112
        %v1736 = vpop.permute.xlu0 %1735
        %1737 = vrot.lane.b32.xlu0 %v1265, 112
        %v1738 = vpop.permute.xlu0 %1737
        %v1744 = vsel %vm715, %v1727, 0
        %v1747 = vsel %vm715, %v1728, 0
        %v1750 = vsel %vm715, %v1729, 0
        %v1753 = vsel %vm715, %v1730, 0
        %1755 = vmatprep.subr.mxu0 0.0
        %1756 = vmatpush1.msra.mxu0 %v1732
        %1757 = vmatprep.subr.mxu0 0.0
        %1758 = vmatpush1.msra.mxu0 %v1734
        %1759 = vmatprep.subr.mxu0 0.0
        %1760 = vmatpush1.msra.mxu0 %v1736
        %1761 = vmatprep.subr.mxu0 0.0
        %1762 = vmatpush1.msra.mxu0 %v1738
        %1763 = vmatprep.subr.mxu0 0.0
        %1764 = vmatpush1.msra.mxu0 0.0
        %1765 = vmatprep.subr.mxu0 0.0
        %1766 = vmatpush1.msra.mxu0 0.0
        %1767 = vmatprep.subr.mxu0 0.0
        %1768 = vmatpush1.msra.mxu0 0.0
        %1769 = vmatprep.subr.mxu0 0.0
        %1770 = vmatpush1.msra.mxu0 0.0
        %1771 = vmatprep.subr.mxu0 0.0
        %1772 = vmatpush1.msra.mxu0 0.0
        %1773 = vmatprep.subr.mxu0 0.0
        %1774 = vmatpush1.msra.mxu0 0.0
        %1775 = vmatprep.subr.mxu0 0.0
        %1776 = vmatpush1.msra.mxu0 0.0
        %1777 = vmatprep.subr.mxu0 0.0
        %1778 = vmatpush1.msra.mxu0 0.0
        %1779 = vmatprep.subr.mxu0 0.0
        %1780 = vmatpush1.msra.mxu0 0.0
        %1781 = vmatprep.subr.mxu0 0.0
        %1782 = vmatpush1.msra.mxu0 0.0
        %1783 = vmatprep.subr.mxu0 0.0
        %1784 = vmatpush1.msra.mxu0 0.0
        %1785 = vmatprep.subr.mxu0 0.0
        %1786 = vmatpush1.msra.mxu0 0.0
        %1787 = vmatprep.subr.mxu0 0.0
        %1788 = vmatpush1.msra.mxu0 0.0
        %1789 = vmatprep.subr.mxu0 0.0
        %1790 = vmatpush1.msra.mxu0 0.0
        %1791 = vmatprep.subr.mxu0 0.0
        %1792 = vmatpush1.msra.mxu0 0.0
        %1793 = vmatprep.subr.mxu0 0.0
        %1794 = vmatpush1.msra.mxu0 0.0
        %1795 = vmatprep.subr.mxu0 0.0
        %1796 = vmatpush1.msra.mxu0 0.0
        %1797 = vmatprep.subr.mxu0 0.0
        %1798 = vmatpush1.msra.mxu0 0.0
        %1799 = vmatprep.subr.mxu0 0.0
        %1800 = vmatpush1.msra.mxu0 0.0
        %1801 = vmatprep.subr.mxu0 0.0
        %1802 = vmatpush1.msra.mxu0 0.0
        %1803 = vmatprep.subr.mxu0 0.0
        %1804 = vmatpush1.msra.mxu0 0.0
        %1805 = vmatprep.subr.mxu0 0.0
        %1806 = vmatpush1.msra.mxu0 0.0
        %1807 = vmatprep.subr.mxu0 0.0
        %1808 = vmatpush1.msra.mxu0 0.0
        %1809 = vmatprep.subr.mxu0 0.0
        %1810 = vmatpush1.msra.mxu0 0.0
        %1811 = vmatprep.subr.mxu0 0.0
        %1812 = vmatpush1.msra.mxu0 0.0
        %1813 = vmatprep.subr.mxu0 0.0
        %1814 = vmatpush1.msra.mxu0 0.0
        %1815 = vmatprep.subr.mxu0 0.0
        %1816 = vmatpush1.msra.mxu0 0.0
        %1817 = vmatprep.subr.mxu0 0.0
        %1818 = vmatpush1.msra.mxu0 0.0
        %1819 = vmatprep.mubr.f32.mxu0 0.0
        %1820 = vmatmul.mubr.f32.gmra.mrb[0].mxu0 %v1744
        %v1821 = vpop.f32.mrb[0].mxu0
        %v1822 = vadd.f32 0.0, %v1821
        %v1823 = vpop.f32.mrb[0].mxu0
        %1824 = vmatprep.mubr.f32.mxu0 0.0
        %1825 = vmatmul.mubr.f32.gmra.mrb[0].mxu0 %v1747
        %v1826 = vpop.f32.mrb[0].mxu0
        %v1827 = vadd.f32 0.0, %v1826
        %v1828 = vpop.f32.mrb[0].mxu0
        %1829 = vmatprep.mubr.f32.mxu0 0.0
        %1830 = vmatmul.mubr.f32.gmra.mrb[0].mxu0 %v1750
        %v1831 = vpop.f32.mrb[0].mxu0
        %v1832 = vadd.f32 0.0, %v1831
        %v1833 = vpop.f32.mrb[0].mxu0
        %1834 = vmatprep.mubr.f32.mxu0 0.0
        %1835 = vmatmul.mubr.f32.gmra.mrb[0].mxu0 %v1753
        %v1836 = vpop.f32.mrb[0].mxu0
        %v1837 = vadd.f32 0.0, %v1836
        %v1838 = vpop.f32.mrb[0].mxu0
        %1839 = vdwg.mxu0
        %1844 = vrot.lane.b32.xlu0 %v1822, 16
        %v1845 = vpop.permute.xlu0 %1844
        %1846 = vrot.lane.b32.xlu0 %v1827, 16
        %v1847 = vpop.permute.xlu0 %1846
        %1848 = vrot.lane.b32.xlu0 %v1832, 16
        %v1849 = vpop.permute.xlu0 %1848
        %1850 = vrot.lane.b32.xlu0 %v1837, 16
        %v1851 = vpop.permute.xlu0 %1850
        %vm1856 = vcmask 261248
        %1857 = vst.msk [vmem:[#allocation3] sm:$0xff] %vm1856, %v1845
        %1858 = vst.msk [vmem:[#allocation3 + $0x8] sm:$0xff] %vm1856, %v1847
        %1859 = vst.msk [vmem:[#allocation3 + $0x10] sm:$0xff] %vm1856, %v1849
        %1860 = vst.msk [vmem:[#allocation3 + $0x18] sm:$0xff] %vm1856, %v1851
        %v1861 = vld [vmem:[#allocation3] sm:$0xff]
        %v1862 = vld [vmem:[#allocation3 + $0x8] sm:$0xff]
        %v1863 = vld [vmem:[#allocation3 + $0x10] sm:$0xff]
        %v1864 = vld [vmem:[#allocation3 + $0x18] sm:$0xff]
        %1865 = vrot.lane.b32.xlu0 %v1250, 96
        %v1866 = vpop.permute.xlu0 %1865
        %1867 = vrot.lane.b32.xlu0 %v1255, 96
        %v1868 = vpop.permute.xlu0 %1867
        %1869 = vrot.lane.b32.xlu0 %v1260, 96
        %v1870 = vpop.permute.xlu0 %1869
        %1871 = vrot.lane.b32.xlu0 %v1265, 96
        %v1872 = vpop.permute.xlu0 %1871
        %v1877 = vadd.f32 %v1861, %v1866
        %v1878 = vadd.f32 %v1862, %v1868
        %v1879 = vadd.f32 %v1863, %v1870
        %v1880 = vadd.f32 %v1864, %v1872
        %v1882 = vlaneseq
        %v1883 = vshrl.u32 %v1882, 7
        %v1884 = vsub.s32 0, %v1883
        %v1885 = vrot.slane %v1182, %v1884
        %v1887 = vadd.f32 %v1877, %v1885
        %v1888 = vadd.f32 %v1878, %v1885
        %v1889 = vadd.f32 %v1879, %v1885
        %v1890 = vadd.f32 %v1880, %v1885
        %1891 = vst.msk [vmem:[%s380] sm:$0xff] %vm715, %v1887
        %1892 = vst.msk [vmem:[%s380 + $0x8] sm:$0xff] %vm715, %v1888
        %1893 = vst.msk [vmem:[%s380 + $0x10] sm:$0xff] %vm715, %v1889
        %1894 = vst.msk [vmem:[%s380 + $0x18] sm:$0xff] %vm715, %v1890
        %s1895 = sand.u32 %s233, 1
        %s1896 = scalar_lea.sflag [#allocation5], %s1895
        %s1897 = sand.u32 %s233, 1
        %s1898 = smul.addr %s1897, 32
        %s1899 = scalar_lea.vmem [#allocation4], %s1898
        // Predicated region
        $region53: #{tpu_custom_call.1} parent=51 // pred_check
          %p1900 = pneg %p243
        $region54: #{tpu_custom_call.1} parent=51 // pred_check_branch
          %1902 = sbr.rel (%p1900) target = $region56
        $region55: #{tpu_custom_call.1} parent=51 // pred_region
          %s1904 = ssub.s32 512, 512
          %1905 = vsyncadd %s1896, %s1904
          %s1906 = smul.addr %s22, 4
          %s1907 = smul.addr %s1906, 128
          %s1908 = scalar_lea.hbm %s8, %s1907
          %s1909 = sshll.u32 %s1899, 4
          %s1910 = int_to_ptr.vmem [resolvable:$true] %s1909
          %1915 = dma.vmem_to_hbm [thread:$0]  %s1910, 512, %s1908, %s1896, 128, 128, 8
        $region56: #{tpu_custom_call.1} parent=51 // pred_fallthru
          _
      $region52: #{tpu_custom_call.1} parent=5 // pred_fallthru
        _
      %p1916 = scmp.le.s32.totalorder 2, %s17
      // Predicated region
      $region57: #{tpu_custom_call.1} parent=5 // pred_check
        %p1917 = pneg %p1916
      $region58: #{tpu_custom_call.1} parent=5 // pred_check_branch
        %1919 = sbr.rel (%p1917) target = $region60
      $region59: #{tpu_custom_call.1} parent=5 // pred_region
        %s1920 = ssub.s32 %s17, 2
        // Predicated region
        $region61: #{tpu_custom_call.1} parent=59 // pred_check
          %p1921 = pneg %p249
        $region62: #{tpu_custom_call.1} parent=59 // pred_check_branch
          %1923 = sbr.rel (%p1921) target = $region64
        $region63: #{tpu_custom_call.1} parent=59 // pred_region
          %s1924 = sand.u32 %s234, 1
          %s1925 = scalar_lea.sflag [#allocation5], %s1924
          %s1926 = sand.u32 %s234, 1
          %s1927 = smul.addr %s1926, 32
          %s1928 = scalar_lea.vmem [#allocation4], %s1927
          %1929 = dma.done %s1925, 512
        $region64: #{tpu_custom_call.1} parent=59 // pred_fallthru
          _
      $region60: #{tpu_custom_call.1} parent=5 // pred_fallthru
        _
    $region6: #{tpu_custom_call.1} parent=1 // loop_footer
      %s21 = sadd.s32 1, %s17
    $region7: #{tpu_custom_call.1} parent=1 // loop_footer_branch
      %16 = sbr.rel target = $region3
    $region8: #{tpu_custom_call.1} parent=1 // loop_exit
      _
    %1930 = vsyncpa [#allocation5], 1
    %s1931 = scalar_lea.sflag [#allocation5], 1
    %1932 = vsyncpa %s1931, 1

</llo_original>
